<compile_context>
chip_gen: v6e
topology: v6e:2x2x1
jax: 0.10.0
libtpu: 0.0.40
codegen_flags: <defaults>
</compile_context>

<pallas_src>
import numpy as np
import jax
import jax.numpy as jnp
from jax import lax
from jax.experimental import pallas as pl
from jax.experimental.pallas import tpu as pltpu


def _dcr_kernel(x_ref, a1_ref, b1_ref, a2_ref, b2_ref, alpha_ref, o_ref):
    # x_ref   : (1, R, L)   one image; r rows, W and C folded into the lane axis
    # a1/a2   : (3, L, L)   banded conv weights per input super-row offset
    # b1/b2   : (1, L)      biases tiled over (r*W) (lane-dense)
    # alpha   : (1, 1)      shared PReLU slope in SMEM (scalar path)
    # o_ref   : (1, R, L)
    R = x_ref.shape[1]
    x = x_ref[0]                                       # (R, L) f32

    # Constant super-row-shift operators (vertical "same" padding) as tiny
    # matmuls: rows that would read out of the image become exact zeros, so
    # no padded scratch / offset sub-window stores are needed.
    ii = lax.broadcasted_iota(jnp.int32, (R, R), 0)
    jj = lax.broadcasted_iota(jnp.int32, (R, R), 1)
    s_dn = (jj == ii - 1).astype(jnp.float32)          # (s_dn @ t)[r] = t[r-1]
    s_up = (jj == ii + 1).astype(jnp.float32)          # (s_up @ t)[r] = t[r+1]

    def conv3x3(v, a_ref, b_ref):
        # One matmul per input super-row offset; 3x3 taps + channel mixing are
        # already folded into the banded (L, L) matrices.
        t0 = jnp.dot(v, a_ref[0], preferred_element_type=jnp.float32)  # off = -1
        t1 = jnp.dot(v, a_ref[1], preferred_element_type=jnp.float32)  # off =  0
        t2 = jnp.dot(v, a_ref[2], preferred_element_type=jnp.float32)  # off = +1
        y = (t1
             + jnp.dot(s_dn, t0, preferred_element_type=jnp.float32)
             + jnp.dot(s_up, t2, preferred_element_type=jnp.float32))
        return y + b_ref[...]                          # (R, L) + (1, L)

    alpha = alpha_ref[0, 0]                            # scalar from SMEM

    y1 = conv3x3(x, a1_ref, b1_ref)
    act = jnp.where(y1 >= 0, y1, alpha * y1)           # PReLU, shared slope
    y2 = conv3x3(act, a2_ref, b2_ref)
    o_ref[0] = (y2 + x).astype(o_ref.dtype)            # fused residual add


def _pick_row_pack(H, W, C, max_lanes=512):
    """Smallest r with H % r == 0 and (r*W*C) % 128 == 0 (full-lane tiles),
    capped so the (L, L) band weights stay small; falls back to r = 1."""
    for r in range(1, H + 1):
        L = r * W * C
        if L > max_lanes:
            break
        if H % r == 0 and L % 128 == 0:
            return r
    return 1


def _make_band_weights(w, W, C, r):
    """w: (3, 3, C, C) HWIO  ->  A: (3, L, L), L = r*W*C.

    A[o, (ri, wi, ci), (ro, wo, co)] = w[dy, dx, ci, co] with
      dy = ri - ro + 1 + (o - 1) * r,  dx = wi - wo + 1,
    and zero whenever dy or dx falls outside [0, 2].  Index o selects the
    input super-row offset {-1, 0, +1}.  W padding is implicit (missing band
    entries); H padding is handled by the row-shift matrices in the kernel."""
    off = np.arange(3).reshape(3, 1, 1, 1, 1) - 1
    ri = np.arange(r).reshape(1, r, 1, 1, 1)
    wi = np.arange(W).reshape(1, 1, W, 1, 1)
    ro = np.arange(r).reshape(1, 1, 1, r, 1)
    wo = np.arange(W).reshape(1, 1, 1, 1, W)
    dy = np.broadcast_to(ri - ro + 1 + off * r, (3, r, W, r, W))
    dx = np.broadcast_to(wi - wo + 1, (3, r, W, r, W))
    valid = (dy >= 0) & (dy <= 2) & (dx >= 0) & (dx <= 2)
    blocks = w[np.clip(dy, 0, 2), np.clip(dx, 0, 2)]            # (3,r,W,r,W,C,C)
    blocks = blocks * jnp.asarray(valid, w.dtype)[..., None, None]
    a = jnp.transpose(blocks, (0, 1, 2, 5, 3, 4, 6))            # (3, ri, wi, ci, ro, wo, co)
    L = r * W * C
    return a.reshape(3, L, L)


def dcr_block(x_nchw, w1, b1, alpha, w2, b2):
    """x_nchw: (N, C, H, W) float32; w*: (3,3,C,C) HWIO; b*: (C,); alpha scalar."""
    N, C, H, W = x_nchw.shape
    r = _pick_row_pack(H, W, C)
    R, L = H // r, r * W * C

    # NCHW -> NHWC -> fold (r rows, W, C) into one lane-dense axis (no jnp.pad:
    # "same" padding lives in the banded weights / shift matrices).
    x = jnp.transpose(x_nchw, (0, 2, 3, 1)).reshape(N, R, L).astype(jnp.float32)

    a1 = _make_band_weights(w1.astype(jnp.float32), W, C, r)    # (3, L, L)
    a2 = _make_band_weights(w2.astype(jnp.float32), W, C, r)
    b1r = jnp.tile(b1.astype(jnp.float32), r * W).reshape(1, L)
    b2r = jnp.tile(b2.astype(jnp.float32), r * W).reshape(1, L)
    alpha_r = jnp.asarray(alpha, jnp.float32).reshape(1, 1)

    out = pl.pallas_call(
        _dcr_kernel,
        out_shape=jax.ShapeDtypeStruct((N, R, L), jnp.float32),
        grid_spec=pltpu.PrefetchScalarGridSpec(
            num_scalar_prefetch=0,
            grid=(N,),
            in_specs=[
                pl.BlockSpec((1, R, L), lambda n: (n, 0, 0)),      # x (per image)
                pl.BlockSpec((3, L, L), lambda n: (0, 0, 0)),      # banded w1 (resident)
                pl.BlockSpec((1, L), lambda n: (0, 0)),            # bias1 (tiled)
                pl.BlockSpec((3, L, L), lambda n: (0, 0, 0)),      # banded w2 (resident)
                pl.BlockSpec((1, L), lambda n: (0, 0)),            # bias2 (tiled)
                pl.BlockSpec(memory_space=pltpu.MemorySpace.SMEM), # alpha scalar
            ],
            out_specs=pl.BlockSpec((1, R, L), lambda n: (n, 0, 0)),  # lane-dense out
        ),
        compiler_params=pltpu.CompilerParams(
            dimension_semantics=("parallel",)),
    )(x, a1, b1r, a2, b2r, alpha_r)

    # (N, R, L) -> (N, H, W, C) -> NCHW
    return jnp.transpose(out.reshape(N, H, W, C), (0, 3, 1, 2))


def _reference(x_nchw, w1, b1, alpha, w2, b2):
    """Pure-JAX reference (NHWC convs) matching the PyTorch forward."""
    x = jnp.transpose(x_nchw, (0, 2, 3, 1))
    dn = ('NHWC', 'HWIO', 'NHWC')
    y = lax.conv_general_dilated(x, w1, (1, 1), 'SAME', dimension_numbers=dn) + b1
    y = jnp.where(y >= 0, y, alpha * y)                      # PReLU, shared alpha
    y = lax.conv_general_dilated(y, w2, (1, 1), 'SAME', dimension_numbers=dn) + b2
    y = y + x
    return jnp.transpose(y, (0, 3, 1, 2))


if __name__ == "__main__":
    N, C, H, W = 2, 4, 16, 16
    key = jax.random.PRNGKey(0)
    kx, k1, k2, k3, k4 = jax.random.split(key, 5)

    x = jax.random.normal(kx, (N, C, H, W), dtype=jnp.float32)

    # Deterministic parameter init (PyTorch-like uniform bound 1/sqrt(fan_in)).
    bound = 1.0 / (C * 3 * 3) ** 0.5
    w1 = jax.random.uniform(k1, (3, 3, C, C), jnp.float32, -bound, bound)  # HWIO
    b1 = jax.random.uniform(k2, (C,), jnp.float32, -bound, bound)
    w2 = jax.random.uniform(k3, (3, 3, C, C), jnp.float32, -bound, bound)
    b2 = jax.random.uniform(k4, (C,), jnp.float32, -bound, bound)
    alpha = jnp.array(0.25, jnp.float32)                                   # PReLU default

    out = jax.jit(dcr_block)(x, w1, b1, alpha, w2, b2)
    out = jax.block_until_ready(out)

    ref = _reference(x, w1, b1, alpha, w2, b2)
    assert out.shape == (N, C, H, W)
    err = jnp.max(jnp.abs(out - ref))
    assert jnp.allclose(out, ref, atol=1e-4, rtol=1e-4), f"max err {err}"

    print("KERNEL_OK")
</pallas_src>

<mosaic_0001>
module attributes {stable_mosaic.version = 11 : i64} {
  func.func @_dcr_kernel(%arg0: i32, %arg1: memref<1x8x128xf32, #tpu.memory_space<vmem>>, %arg2: memref<3x128x128xf32, #tpu.memory_space<vmem>>, %arg3: memref<1x128xf32, #tpu.memory_space<vmem>>, %arg4: memref<3x128x128xf32, #tpu.memory_space<vmem>>, %arg5: memref<1x128xf32, #tpu.memory_space<vmem>>, %arg6: memref<1x1xf32, #tpu.memory_space<smem>>, %arg7: memref<1x8x128xf32, #tpu.memory_space<vmem>>) attributes {dimension_semantics = [#tpu.dimension_semantics<parallel>], iteration_bounds = array<i64: 2>, scalar_prefetch = 0 : i64, scratch_operands = 0 : i64, tpu.core_type = #tpu.core_type<tc>, window_params = [{transform_indices = @transform_0, window_bounds = array<i64: 1, 8, 128>}, {pipeline_mode = #tpu.pipeline_mode<synchronous>, transform_indices = @transform_1, window_bounds = array<i64: 3, 128, 128>}, {pipeline_mode = #tpu.pipeline_mode<synchronous>, transform_indices = @transform_2, window_bounds = array<i64: 1, 128>}, {pipeline_mode = #tpu.pipeline_mode<synchronous>, transform_indices = @transform_3, window_bounds = array<i64: 3, 128, 128>}, {pipeline_mode = #tpu.pipeline_mode<synchronous>, transform_indices = @transform_4, window_bounds = array<i64: 1, 128>}, {transform_indices = @transform_5, window_bounds = array<i64: 1, 1>}, {transform_indices = @transform_6, window_bounds = array<i64: 1, 8, 128>}]} {
    %c0 = arith.constant 0 : index
    %c0_0 = arith.constant 0 : index
    %c0_1 = arith.constant 0 : index
    %0 = vector.load %arg1[%c0, %c0_0, %c0_1] : memref<1x8x128xf32, #tpu.memory_space<vmem>>, vector<1x8x128xf32>
    %1 = vector.shape_cast %0 : vector<1x8x128xf32> to vector<8x128xf32>
    %2 = tpu.iota {dimensions = array<i32: 0>} : vector<8x8xi32>
    %3 = tpu.iota {dimensions = array<i32: 1>} : vector<8x8xi32>
    %c1_i32 = arith.constant 1 : i32
    %4 = vector.broadcast %c1_i32 : i32 to vector<8x8xi32>
    %5 = arith.subi %2, %4 : vector<8x8xi32>
    %6 = arith.cmpi eq, %3, %5 : vector<8x8xi32>
    %7 = arith.extui %6 : vector<8x8xi1> to vector<8x8xi32>
    %8 = arith.sitofp %7 : vector<8x8xi32> to vector<8x8xf32>
    %c1_i32_2 = arith.constant 1 : i32
    %9 = vector.broadcast %c1_i32_2 : i32 to vector<8x8xi32>
    %10 = arith.addi %2, %9 : vector<8x8xi32>
    %11 = arith.cmpi eq, %3, %10 : vector<8x8xi32>
    %12 = arith.extui %11 : vector<8x8xi1> to vector<8x8xi32>
    %13 = arith.sitofp %12 : vector<8x8xi32> to vector<8x8xf32>
    %c0_3 = arith.constant 0 : index
    %c0_4 = arith.constant 0 : index
    %14 = memref.load %arg6[%c0_3, %c0_4] : memref<1x1xf32, #tpu.memory_space<smem>>
    %c0_5 = arith.constant 0 : index
    %c0_6 = arith.constant 0 : index
    %c0_7 = arith.constant 0 : index
    %15 = vector.load %arg2[%c0_5, %c0_6, %c0_7] : memref<3x128x128xf32, #tpu.memory_space<vmem>>, vector<1x128x128xf32>
    %16 = vector.shape_cast %15 : vector<1x128x128xf32> to vector<128x128xf32>
    %cst = arith.constant dense<0.000000e+00> : vector<8x128xf32>
    %17 = tpu.matmul %1, %16, %cst {dimension_numbers = #tpu.dot_dimension_numbers<[1], [0], [0], [1], [0, 0, 1, 1], [], []>} : vector<8x128xf32>, vector<128x128xf32>, vector<8x128xf32> -> vector<8x128xf32>
    %c1 = arith.constant 1 : index
    %c0_8 = arith.constant 0 : index
    %c0_9 = arith.constant 0 : index
    %18 = vector.load %arg2[%c1, %c0_8, %c0_9] : memref<3x128x128xf32, #tpu.memory_space<vmem>>, vector<1x128x128xf32>
    %19 = vector.shape_cast %18 : vector<1x128x128xf32> to vector<128x128xf32>
    %cst_10 = arith.constant dense<0.000000e+00> : vector<8x128xf32>
    %20 = tpu.matmul %1, %19, %cst_10 {dimension_numbers = #tpu.dot_dimension_numbers<[1], [0], [0], [1], [0, 0, 1, 1], [], []>} : vector<8x128xf32>, vector<128x128xf32>, vector<8x128xf32> -> vector<8x128xf32>
    %c2 = arith.constant 2 : index
    %c0_11 = arith.constant 0 : index
    %c0_12 = arith.constant 0 : index
    %21 = vector.load %arg2[%c2, %c0_11, %c0_12] : memref<3x128x128xf32, #tpu.memory_space<vmem>>, vector<1x128x128xf32>
    %22 = vector.shape_cast %21 : vector<1x128x128xf32> to vector<128x128xf32>
    %cst_13 = arith.constant dense<0.000000e+00> : vector<8x128xf32>
    %23 = tpu.matmul %1, %22, %cst_13 {dimension_numbers = #tpu.dot_dimension_numbers<[1], [0], [0], [1], [0, 0, 1, 1], [], []>} : vector<8x128xf32>, vector<128x128xf32>, vector<8x128xf32> -> vector<8x128xf32>
    %cst_14 = arith.constant dense<0.000000e+00> : vector<8x128xf32>
    %24 = tpu.matmul %8, %17, %cst_14 {dimension_numbers = #tpu.dot_dimension_numbers<[1], [0], [0], [1], [0, 0, 1, 1], [], []>} : vector<8x8xf32>, vector<8x128xf32>, vector<8x128xf32> -> vector<8x128xf32>
    %25 = arith.addf %20, %24 : vector<8x128xf32>
    %cst_15 = arith.constant dense<0.000000e+00> : vector<8x128xf32>
    %26 = tpu.matmul %13, %23, %cst_15 {dimension_numbers = #tpu.dot_dimension_numbers<[1], [0], [0], [1], [0, 0, 1, 1], [], []>} : vector<8x8xf32>, vector<8x128xf32>, vector<8x128xf32> -> vector<8x128xf32>
    %27 = arith.addf %25, %26 : vector<8x128xf32>
    %c0_16 = arith.constant 0 : index
    %c0_17 = arith.constant 0 : index
    %28 = vector.load %arg3[%c0_16, %c0_17] : memref<1x128xf32, #tpu.memory_space<vmem>>, vector<1x128xf32>
    %29 = vector.broadcast %28 : vector<1x128xf32> to vector<8x128xf32>
    %30 = arith.addf %27, %29 : vector<8x128xf32>
    %cst_18 = arith.constant 0.000000e+00 : f32
    %31 = vector.broadcast %cst_18 : f32 to vector<8x128xf32>
    %32 = arith.cmpf oge, %30, %31 : vector<8x128xf32>
    %33 = vector.broadcast %14 : f32 to vector<8x128xf32>
    %34 = arith.mulf %33, %30 : vector<8x128xf32>
    %35 = arith.select %32, %30, %34 : vector<8x128xi1>, vector<8x128xf32>
    %c0_19 = arith.constant 0 : index
    %c0_20 = arith.constant 0 : index
    %c0_21 = arith.constant 0 : index
    %36 = vector.load %arg4[%c0_19, %c0_20, %c0_21] : memref<3x128x128xf32, #tpu.memory_space<vmem>>, vector<1x128x128xf32>
    %37 = vector.shape_cast %36 : vector<1x128x128xf32> to vector<128x128xf32>
    %cst_22 = arith.constant dense<0.000000e+00> : vector<8x128xf32>
    %38 = tpu.matmul %35, %37, %cst_22 {dimension_numbers = #tpu.dot_dimension_numbers<[1], [0], [0], [1], [0, 0, 1, 1], [], []>} : vector<8x128xf32>, vector<128x128xf32>, vector<8x128xf32> -> vector<8x128xf32>
    %c1_23 = arith.constant 1 : index
    %c0_24 = arith.constant 0 : index
    %c0_25 = arith.constant 0 : index
    %39 = vector.load %arg4[%c1_23, %c0_24, %c0_25] : memref<3x128x128xf32, #tpu.memory_space<vmem>>, vector<1x128x128xf32>
    %40 = vector.shape_cast %39 : vector<1x128x128xf32> to vector<128x128xf32>
    %cst_26 = arith.constant dense<0.000000e+00> : vector<8x128xf32>
    %41 = tpu.matmul %35, %40, %cst_26 {dimension_numbers = #tpu.dot_dimension_numbers<[1], [0], [0], [1], [0, 0, 1, 1], [], []>} : vector<8x128xf32>, vector<128x128xf32>, vector<8x128xf32> -> vector<8x128xf32>
    %c2_27 = arith.constant 2 : index
    %c0_28 = arith.constant 0 : index
    %c0_29 = arith.constant 0 : index
    %42 = vector.load %arg4[%c2_27, %c0_28, %c0_29] : memref<3x128x128xf32, #tpu.memory_space<vmem>>, vector<1x128x128xf32>
    %43 = vector.shape_cast %42 : vector<1x128x128xf32> to vector<128x128xf32>
    %cst_30 = arith.constant dense<0.000000e+00> : vector<8x128xf32>
    %44 = tpu.matmul %35, %43, %cst_30 {dimension_numbers = #tpu.dot_dimension_numbers<[1], [0], [0], [1], [0, 0, 1, 1], [], []>} : vector<8x128xf32>, vector<128x128xf32>, vector<8x128xf32> -> vector<8x128xf32>
    %cst_31 = arith.constant dense<0.000000e+00> : vector<8x128xf32>
    %45 = tpu.matmul %8, %38, %cst_31 {dimension_numbers = #tpu.dot_dimension_numbers<[1], [0], [0], [1], [0, 0, 1, 1], [], []>} : vector<8x8xf32>, vector<8x128xf32>, vector<8x128xf32> -> vector<8x128xf32>
    %46 = arith.addf %41, %45 : vector<8x128xf32>
    %cst_32 = arith.constant dense<0.000000e+00> : vector<8x128xf32>
    %47 = tpu.matmul %13, %44, %cst_32 {dimension_numbers = #tpu.dot_dimension_numbers<[1], [0], [0], [1], [0, 0, 1, 1], [], []>} : vector<8x8xf32>, vector<8x128xf32>, vector<8x128xf32> -> vector<8x128xf32>
    %48 = arith.addf %46, %47 : vector<8x128xf32>
    %c0_33 = arith.constant 0 : index
    %c0_34 = arith.constant 0 : index
    %49 = vector.load %arg5[%c0_33, %c0_34] : memref<1x128xf32, #tpu.memory_space<vmem>>, vector<1x128xf32>
    %50 = vector.broadcast %49 : vector<1x128xf32> to vector<8x128xf32>
    %51 = arith.addf %48, %50 : vector<8x128xf32>
    %52 = arith.addf %51, %1 : vector<8x128xf32>
    %c0_35 = arith.constant 0 : index
    %c0_36 = arith.constant 0 : index
    %c0_37 = arith.constant 0 : index
    %53 = vector.load %arg7[%c0_35, %c0_36, %c0_37] : memref<1x8x128xf32, #tpu.memory_space<vmem>>, vector<1x8x128xf32>
    %54 = vector.shape_cast %53 : vector<1x8x128xf32> to vector<8x128xf32>
    %55 = vector.shape_cast %52 : vector<8x128xf32> to vector<1x8x128xf32>
    tpu.vector_store %arg7[%c0_35, %c0_36, %c0_37], %55 {strides = array<i32>} : memref<1x8x128xf32, #tpu.memory_space<vmem>>, vector<1x8x128xf32>,
    return
  }
  func.func @transform_0(%arg0: i32) -> (i32, i32, i32) {
    %c0_i32 = arith.constant 0 : i32
    %c0_i32_0 = arith.constant 0 : i32
    %c0_i32_1 = arith.constant 0 : i32
    return %arg0, %c0_i32, %c0_i32_0 : i32, i32, i32
  }
  func.func @transform_1(%arg0: i32) -> (i32, i32, i32) {
    %c0_i32 = arith.constant 0 : i32
    %c0_i32_0 = arith.constant 0 : i32
    %c0_i32_1 = arith.constant 0 : i32
    %c0_i32_2 = arith.constant 0 : i32
    return %c0_i32, %c0_i32_0, %c0_i32_1 : i32, i32, i32
  }
  func.func @transform_2(%arg0: i32) -> (i32, i32) {
    %c0_i32 = arith.constant 0 : i32
    %c0_i32_0 = arith.constant 0 : i32
    %c0_i32_1 = arith.constant 0 : i32
    return %c0_i32, %c0_i32_0 : i32, i32
  }
  func.func @transform_3(%arg0: i32) -> (i32, i32, i32) {
    %c0_i32 = arith.constant 0 : i32
    %c0_i32_0 = arith.constant 0 : i32
    %c0_i32_1 = arith.constant 0 : i32
    %c0_i32_2 = arith.constant 0 : i32
    return %c0_i32, %c0_i32_0, %c0_i32_1 : i32, i32, i32
  }
  func.func @transform_4(%arg0: i32) -> (i32, i32) {
    %c0_i32 = arith.constant 0 : i32
    %c0_i32_0 = arith.constant 0 : i32
    %c0_i32_1 = arith.constant 0 : i32
    return %c0_i32, %c0_i32_0 : i32, i32
  }
  func.func @transform_5(%arg0: i32) -> (i32, i32) {
    %c0_i32 = arith.constant 0 : i32
    %c0_i32_0 = arith.constant 0 : i32
    %c0_i32_1 = arith.constant 0 : i32
    return %c0_i32, %c0_i32_0 : i32, i32
  }
  func.func @transform_6(%arg0: i32) -> (i32, i32, i32) {
    %c0_i32 = arith.constant 0 : i32
    %c0_i32_0 = arith.constant 0 : i32
    %c0_i32_1 = arith.constant 0 : i32
    return %arg0, %c0_i32, %c0_i32_0 : i32, i32, i32
  }
}

</mosaic_0001>

<llo_original>
// kernel: tile.13
$region0: #{tile.13}
  #allocation0 [shape = 's32[1]{0}', space=sflag, size = 0x4, scoped, tag = 'scoped memory for tile.13']
  %s0 = inlined_call_operand.vmem [shape: f32[4], index: 0, kind: input, shape index: {}]
  %s1 = inlined_call_operand.vmem [shape: f32[32,4], index: 1, kind: output, shape index: {}]
  // Predicated region
  $region2: #{tile.13} parent=0 // pred_check
    _
  $region3: #{tile.13} parent=0 // pred_check_branch
    %3 = sbr.rel (0) target = $region5
  $region4: #{tile.13} parent=0 // pred_region
    _
  $region5: #{tile.13} parent=0 // pred_fallthru
    _
  %v4 = vld [vmem:[%s0] ss:$0 sm:$0xff]
  %5 = vst [vmem:[%s1] sm:$0xff] %v4
  %s6 = scalar_lea.vmem %s1, 8
  %7 = vst [vmem:[%s6] sm:$0xff] %v4
  %s8 = scalar_lea.vmem %s1, 16
  %9 = vst [vmem:[%s8] sm:$0xff] %v4
  %s10 = scalar_lea.vmem %s1, 24
  %11 = vst [vmem:[%s10] sm:$0xff] %v4

// kernel: tile.14
$region0: #{tile.14}
  %s0 = inlined_call_operand.vmem [shape: f32[32,4], index: 0, kind: input, shape index: {}]
  %s1 = inlined_call_operand.vmem [shape: f32[1,128], index: 1, kind: output, shape index: {}]
  $region1: #{tile.14} parent=0
    #allocation0 [shape = 'u8[4096]{0}', space=vmem, size = 0x1000, scoped, tag = 'scoped mem for output reshape']
    %v2 = vld [vmem:[%s0] sm:$0x1]
    %vm3 = vcmask 31744
    %4 = vst.msk [vmem:[#allocation0] sm:$0x1] %vm3, %v2
    %s5 = scalar_lea.vmem %s0, 31
    %v6 = vld [vmem:[%s5] sm:$0x1]
    %7 = vrot.lane.b32.xlu0 %v6, 124
    %v8 = vpop.permute.xlu0 %7
    %vm9 = vcmask 1048544
    %10 = vst.msk [vmem:[#allocation0] sm:$0x1] %vm9, %v8
    %s11 = scalar_lea.vmem %s0, 30
    %v12 = vld [vmem:[%s11] sm:$0x1]
    %13 = vrot.lane.b32.xlu0 %v12, 120
    %v14 = vpop.permute.xlu0 %13
    %vm15 = vcmask 1015744
    %16 = vst.msk [vmem:[#allocation0] sm:$0x1] %vm15, %v14
    %s17 = scalar_lea.vmem %s0, 29
    %v18 = vld [vmem:[%s17] sm:$0x1]
    %19 = vrot.lane.b32.xlu0 %v18, 116
    %v20 = vpop.permute.xlu0 %19
    %vm21 = vcmask 982944
    %22 = vst.msk [vmem:[#allocation0] sm:$0x1] %vm21, %v20
    %s23 = scalar_lea.vmem %s0, 28
    %v24 = vld [vmem:[%s23] sm:$0x1]
    %25 = vrot.lane.b32.xlu0 %v24, 112
    %v26 = vpop.permute.xlu0 %25
    %vm27 = vcmask 950144
    %28 = vst.msk [vmem:[#allocation0] sm:$0x1] %vm27, %v26
    %s29 = scalar_lea.vmem %s0, 27
    %v30 = vld [vmem:[%s29] sm:$0x1]
    %31 = vrot.lane.b32.xlu0 %v30, 108
    %v32 = vpop.permute.xlu0 %31
    %vm33 = vcmask 917344
    %34 = vst.msk [vmem:[#allocation0] sm:$0x1] %vm33, %v32
    %s35 = scalar_lea.vmem %s0, 26
    %v36 = vld [vmem:[%s35] sm:$0x1]
    %37 = vrot.lane.b32.xlu0 %v36, 104
    %v38 = vpop.permute.xlu0 %37
    %vm39 = vcmask 884544
    %40 = vst.msk [vmem:[#allocation0] sm:$0x1] %vm39, %v38
    %s41 = scalar_lea.vmem %s0, 25
    %v42 = vld [vmem:[%s41] sm:$0x1]
    %43 = vrot.lane.b32.xlu0 %v42, 100
    %v44 = vpop.permute.xlu0 %43
    %vm45 = vcmask 851744
    %46 = vst.msk [vmem:[#allocation0] sm:$0x1] %vm45, %v44
    %s47 = scalar_lea.vmem %s0, 24
    %v48 = vld [vmem:[%s47] sm:$0x1]
    %49 = vrot.lane.b32.xlu0 %v48, 96
    %v50 = vpop.permute.xlu0 %49
    %vm51 = vcmask 818944
    %52 = vst.msk [vmem:[#allocation0] sm:$0x1] %vm51, %v50
    %s53 = scalar_lea.vmem %s0, 23
    %v54 = vld [vmem:[%s53] sm:$0x1]
    %55 = vrot.lane.b32.xlu0 %v54, 92
    %v56 = vpop.permute.xlu0 %55
    %vm57 = vcmask 786144
    %58 = vst.msk [vmem:[#allocation0] sm:$0x1] %vm57, %v56
    %s59 = scalar_lea.vmem %s0, 22
    %v60 = vld [vmem:[%s59] sm:$0x1]
    %61 = vrot.lane.b32.xlu0 %v60, 88
    %v62 = vpop.permute.xlu0 %61
    %vm63 = vcmask 753344
    %64 = vst.msk [vmem:[#allocation0] sm:$0x1] %vm63, %v62
    %s65 = scalar_lea.vmem %s0, 21
    %v66 = vld [vmem:[%s65] sm:$0x1]
    %67 = vrot.lane.b32.xlu0 %v66, 84
    %v68 = vpop.permute.xlu0 %67
    %vm69 = vcmask 720544
    %70 = vst.msk [vmem:[#allocation0] sm:$0x1] %vm69, %v68
    %s71 = scalar_lea.vmem %s0, 20
    %v72 = vld [vmem:[%s71] sm:$0x1]
    %73 = vrot.lane.b32.xlu0 %v72, 80
    %v74 = vpop.permute.xlu0 %73
    %vm75 = vcmask 687744
    %76 = vst.msk [vmem:[#allocation0] sm:$0x1] %vm75, %v74
    %s77 = scalar_lea.vmem %s0, 19
    %v78 = vld [vmem:[%s77] sm:$0x1]
    %79 = vrot.lane.b32.xlu0 %v78, 76
    %v80 = vpop.permute.xlu0 %79
    %vm81 = vcmask 654944
    %82 = vst.msk [vmem:[#allocation0] sm:$0x1] %vm81, %v80
    %s83 = scalar_lea.vmem %s0, 18
    %v84 = vld [vmem:[%s83] sm:$0x1]
    %85 = vrot.lane.b32.xlu0 %v84, 72
    %v86 = vpop.permute.xlu0 %85
    %vm87 = vcmask 622144
    %88 = vst.msk [vmem:[#allocation0] sm:$0x1] %vm87, %v86
    %s89 = scalar_lea.vmem %s0, 17
    %v90 = vld [vmem:[%s89] sm:$0x1]
    %91 = vrot.lane.b32.xlu0 %v90, 68
    %v92 = vpop.permute.xlu0 %91
    %vm93 = vcmask 589344
    %94 = vst.msk [vmem:[#allocation0] sm:$0x1] %vm93, %v92
    %s95 = scalar_lea.vmem %s0, 16
    %v96 = vld [vmem:[%s95] sm:$0x1]
    %97 = vrot.lane.b32.xlu0 %v96, 64
    %v98 = vpop.permute.xlu0 %97
    %vm99 = vcmask 556544
    %100 = vst.msk [vmem:[#allocation0] sm:$0x1] %vm99, %v98
    %s101 = scalar_lea.vmem %s0, 15
    %v102 = vld [vmem:[%s101] sm:$0x1]
    %103 = vrot.lane.b32.xlu0 %v102, 60
    %v104 = vpop.permute.xlu0 %103
    %vm105 = vcmask 523744
    %106 = vst.msk [vmem:[#allocation0] sm:$0x1] %vm105, %v104
    %s107 = scalar_lea.vmem %s0, 14
    %v108 = vld [vmem:[%s107] sm:$0x1]
    %109 = vrot.lane.b32.xlu0 %v108, 56
    %v110 = vpop.permute.xlu0 %109
    %vm111 = vcmask 490944
    %112 = vst.msk [vmem:[#allocation0] sm:$0x1] %vm111, %v110
    %s113 = scalar_lea.vmem %s0, 13
    %v114 = vld [vmem:[%s113] sm:$0x1]
    %115 = vrot.lane.b32.xlu0 %v114, 52
    %v116 = vpop.permute.xlu0 %115
    %vm117 = vcmask 458144
    %118 = vst.msk [vmem:[#allocation0] sm:$0x1] %vm117, %v116
    %s119 = scalar_lea.vmem %s0, 12
    %v120 = vld [vmem:[%s119] sm:$0x1]
    %121 = vrot.lane.b32.xlu0 %v120, 48
    %v122 = vpop.permute.xlu0 %121
    %vm123 = vcmask 425344
    %124 = vst.msk [vmem:[#allocation0] sm:$0x1] %vm123, %v122
    %s125 = scalar_lea.vmem %s0, 11
    %v126 = vld [vmem:[%s125] sm:$0x1]
    %127 = vrot.lane.b32.xlu0 %v126, 44
    %v128 = vpop.permute.xlu0 %127
    %vm129 = vcmask 392544
    %130 = vst.msk [vmem:[#allocation0] sm:$0x1] %vm129, %v128
    %s131 = scalar_lea.vmem %s0, 10
    %v132 = vld [vmem:[%s131] sm:$0x1]
    %133 = vrot.lane.b32.xlu0 %v132, 40
    %v134 = vpop.permute.xlu0 %133
    %vm135 = vcmask 359744
    %136 = vst.msk [vmem:[#allocation0] sm:$0x1] %vm135, %v134
    %s137 = scalar_lea.vmem %s0, 9
    %v138 = vld [vmem:[%s137] sm:$0x1]
    %139 = vrot.lane.b32.xlu0 %v138, 36
    %v140 = vpop.permute.xlu0 %139
    %vm141 = vcmask 326944
    %142 = vst.msk [vmem:[#allocation0] sm:$0x1] %vm141, %v140
    %s143 = scalar_lea.vmem %s0, 8
    %v144 = vld [vmem:[%s143] sm:$0x1]
    %145 = vrot.lane.b32.xlu0 %v144, 32
    %v146 = vpop.permute.xlu0 %145
    %vm147 = vcmask 294144
    %148 = vst.msk [vmem:[#allocation0] sm:$0x1] %vm147, %v146
    %s149 = scalar_lea.vmem %s0, 7
    %v150 = vld [vmem:[%s149] sm:$0x1]
    %151 = vrot.lane.b32.xlu0 %v150, 28
    %v152 = vpop.permute.xlu0 %151
    %vm153 = vcmask 261344
    %154 = vst.msk [vmem:[#allocation0] sm:$0x1] %vm153, %v152
    %s155 = scalar_lea.vmem %s0, 6
    %v156 = vld [vmem:[%s155] sm:$0x1]
    %157 = vrot.lane.b32.xlu0 %v156, 24
    %v158 = vpop.permute.xlu0 %157
    %vm159 = vcmask 228544
    %160 = vst.msk [vmem:[#allocation0] sm:$0x1] %vm159, %v158
    %s161 = scalar_lea.vmem %s0, 5
    %v162 = vld [vmem:[%s161] sm:$0x1]
    %163 = vrot.lane.b32.xlu0 %v162, 20
    %v164 = vpop.permute.xlu0 %163
    %vm165 = vcmask 195744
    %166 = vst.msk [vmem:[#allocation0] sm:$0x1] %vm165, %v164
    %s167 = scalar_lea.vmem %s0, 4
    %v168 = vld [vmem:[%s167] sm:$0x1]
    %169 = vrot.lane.b32.xlu0 %v168, 16
    %v170 = vpop.permute.xlu0 %169
    %vm171 = vcmask 162944
    %172 = vst.msk [vmem:[#allocation0] sm:$0x1] %vm171, %v170
    %s173 = scalar_lea.vmem %s0, 3
    %v174 = vld [vmem:[%s173] sm:$0x1]
    %175 = vrot.lane.b32.xlu0 %v174, 12
    %v176 = vpop.permute.xlu0 %175
    %vm177 = vcmask 130144
    %178 = vst.msk [vmem:[#allocation0] sm:$0x1] %vm177, %v176
    %s179 = scalar_lea.vmem %s0, 2
    %v180 = vld [vmem:[%s179] sm:$0x1]
    %181 = vrot.lane.b32.xlu0 %v180, 8
    %v182 = vpop.permute.xlu0 %181
    %vm183 = vcmask 97344
    %184 = vst.msk [vmem:[#allocation0] sm:$0x1] %vm183, %v182
    %s185 = scalar_lea.vmem %s0, 1
    %v186 = vld [vmem:[%s185] sm:$0x1]
    %187 = vrot.lane.b32.xlu0 %v186, 4
    %v188 = vpop.permute.xlu0 %187
    %vm189 = vcmask 64544
    %190 = vst.msk [vmem:[#allocation0] sm:$0x1] %vm189, %v188
    %s192 = sshll.u32 1, 1
    %s193 = ssub.s32 %s192, 1
    %v195 = vld [vmem:[#allocation0] sm:%s193]
    %s196 = sshll.u32 1, 1
    %s197 = ssub.s32 %s196, 1
    %198 = vst [vmem:[%s1] sm:%s197] %v195

// kernel: dcr_block.1
$region0: #{dcr_block.1}
  #allocation0 [shape = 'u32[]', space=smem, size = 0x4, offset = 0x4, fixed_abs, tag = 'smem constant byte address 0x4 - core index']
  #allocation1 [shape = 'u32[144,128]{1,0:T(1,128)}', space=vmem, size = 0x12000, scoped, tag = 'internal scratch']
  #allocation2 [shape = 'f32[1,1]{1,0:T(1,128)S(6)}', space=smem, size = 0x200, scoped, tag = 'scoped memory for dcr_block.1']
  %s0 = inlined_call_operand.vmem [shape: f32[2,8,128], index: 0, kind: input, shape index: {}]
  %s1 = inlined_call_operand.vmem [shape: f32[3,128,128], index: 1, kind: input, shape index: {}]
  %s2 = inlined_call_operand.vmem [shape: f32[1,128], index: 2, kind: input, shape index: {}]
  %s3 = inlined_call_operand.vmem [shape: f32[3,128,128], index: 3, kind: input, shape index: {}]
  %s4 = inlined_call_operand.vmem [shape: f32[1,128], index: 4, kind: input, shape index: {}]
  %s5 = inlined_call_operand.<no memory space> [shape: f32[1,1], index: 5, kind: input, shape index: {}]
  %s6 = inlined_call_operand.vmem [shape: f32[2,8,128], index: 6, kind: output, shape index: {}]
  %s7 = sld [smem:[#allocation0]]
  $region57: #{dcr_block.1} parent=0
    _
  %s9 = ssub.s32 1, %s7
  %s10 = scalar_select 0, %s9, %s7
  %11 = sst [smem:[#allocation2]] %s5
  loop: start=0, step=1, limit=4
  $region2: #{dcr_block.1} parent=0 // loop_pre_header
    _
  $region3: #{dcr_block.1} parent=0 // loop_header
    %s13 = sphi 0, %s17
    %p14 = scmp.ge.s32.totalorder %s13, 4
    %s23 = sphi 0, %s25
    %s26 = sphi 0, %s23
    %s27 = sphi 0, %s26
    %s43 = sphi 0, %s27
    %s47 = sphi 0, %s47
    %s49 = sphi 0, %s47
    %s50 = sphi 0, %s49
    %s64 = sphi 0, %s50
    %s68 = sphi 0, %s68
    %s70 = sphi 0, %s68
    %s71 = sphi 0, %s70
    %s85 = sphi 0, %s71
    %s89 = sphi 0, %s89
    %s91 = sphi 0, %s89
    %s92 = sphi 0, %s91
    %s106 = sphi 0, %s92
    %s110 = sphi 0, %s110
    %s112 = sphi 0, %s110
    %s113 = sphi 0, %s112
    %s127 = sphi 0, %s113
    %s131 = sphi 0, %s131
    %s133 = sphi 0, %s131
    %s134 = sphi 0, %s133
    %s148 = sphi 0, %s134
    %s154 = sphi 0, %s156
    %s157 = sphi 0, %s154
    %s158 = sphi 0, %s157
    %s174 = sphi 0, %s158
  $region4: #{dcr_block.1} parent=0 // loop_header_branch
    %16 = sbr.rel (%p14) target = $region8
  $region5: #{dcr_block.1} parent=0 // loop_body
    %s18 = ssub.s32 %s13, 1
    %s19 = ssub.s32 %s13, 2
    %s20 = sadd.s32 %s13, 1
    %s21 = ssub.s32 %s13, %s20
    %p22 = scmp.eq.s32.totalorder %s21, 0
    %s24 = sadd.s32 %s23, 1
    %s25 = scalar_select %p22, %s23, %s24
    %p28 = pneg %p22
    %p29 = scmp.eq.s32.totalorder %s13, 1
    %p30 = por %p28, %p29
    %p31 = scmp.ne.s32.totalorder %s23, %s26
    %p32 = scmp.eq.s32.totalorder %s13, 0
    %p33 = por %p31, %p32
    %p34 = scmp.ne.s32.totalorder %s23, %s26
    %p35 = scmp.eq.s32.totalorder %s18, 1
    %p36 = por %p34, %p35
    %p37 = scmp.ne.s32.totalorder %s26, %s27
    %p38 = scmp.eq.s32.totalorder %s18, 0
    %p39 = por %p37, %p38
    %p40 = scmp.ne.s32.totalorder %s26, %s27
    %p41 = scmp.eq.s32.totalorder %s19, 1
    %p42 = por %p40, %p41
    %p44 = scmp.ne.s32.totalorder %s27, %s43
    %p45 = scmp.eq.s32.totalorder %s19, 0
    %p46 = por %p44, %p45
    %s48 = sadd.s32 %s47, 1
    %p51 = scmp.eq.s32.totalorder %s13, 1
    %p52 = scmp.ne.s32.totalorder %s47, %s49
    %p53 = scmp.eq.s32.totalorder %s13, 0
    %p54 = por %p52, %p53
    %p55 = scmp.ne.s32.totalorder %s47, %s49
    %p56 = scmp.eq.s32.totalorder %s18, 1
    %p57 = por %p55, %p56
    %p58 = scmp.ne.s32.totalorder %s49, %s50
    %p59 = scmp.eq.s32.totalorder %s18, 0
    %p60 = por %p58, %p59
    %p61 = scmp.ne.s32.totalorder %s49, %s50
    %p62 = scmp.eq.s32.totalorder %s19, 1
    %p63 = por %p61, %p62
    %p65 = scmp.ne.s32.totalorder %s50, %s64
    %p66 = scmp.eq.s32.totalorder %s19, 0
    %p67 = por %p65, %p66
    %s69 = sadd.s32 %s68, 1
    %p72 = scmp.eq.s32.totalorder %s13, 1
    %p73 = scmp.ne.s32.totalorder %s68, %s70
    %p74 = scmp.eq.s32.totalorder %s13, 0
    %p75 = por %p73, %p74
    %p76 = scmp.ne.s32.totalorder %s68, %s70
    %p77 = scmp.eq.s32.totalorder %s18, 1
    %p78 = por %p76, %p77
    %p79 = scmp.ne.s32.totalorder %s70, %s71
    %p80 = scmp.eq.s32.totalorder %s18, 0
    %p81 = por %p79, %p80
    %p82 = scmp.ne.s32.totalorder %s70, %s71
    %p83 = scmp.eq.s32.totalorder %s19, 1
    %p84 = por %p82, %p83
    %p86 = scmp.ne.s32.totalorder %s71, %s85
    %p87 = scmp.eq.s32.totalorder %s19, 0
    %p88 = por %p86, %p87
    %s90 = sadd.s32 %s89, 1
    %p93 = scmp.eq.s32.totalorder %s13, 1
    %p94 = scmp.ne.s32.totalorder %s89, %s91
    %p95 = scmp.eq.s32.totalorder %s13, 0
    %p96 = por %p94, %p95
    %p97 = scmp.ne.s32.totalorder %s89, %s91
    %p98 = scmp.eq.s32.totalorder %s18, 1
    %p99 = por %p97, %p98
    %p100 = scmp.ne.s32.totalorder %s91, %s92
    %p101 = scmp.eq.s32.totalorder %s18, 0
    %p102 = por %p100, %p101
    %p103 = scmp.ne.s32.totalorder %s91, %s92
    %p104 = scmp.eq.s32.totalorder %s19, 1
    %p105 = por %p103, %p104
    %p107 = scmp.ne.s32.totalorder %s92, %s106
    %p108 = scmp.eq.s32.totalorder %s19, 0
    %p109 = por %p107, %p108
    %s111 = sadd.s32 %s110, 1
    %p114 = scmp.eq.s32.totalorder %s13, 1
    %p115 = scmp.ne.s32.totalorder %s110, %s112
    %p116 = scmp.eq.s32.totalorder %s13, 0
    %p117 = por %p115, %p116
    %p118 = scmp.ne.s32.totalorder %s110, %s112
    %p119 = scmp.eq.s32.totalorder %s18, 1
    %p120 = por %p118, %p119
    %p121 = scmp.ne.s32.totalorder %s112, %s113
    %p122 = scmp.eq.s32.totalorder %s18, 0
    %p123 = por %p121, %p122
    %p124 = scmp.ne.s32.totalorder %s112, %s113
    %p125 = scmp.eq.s32.totalorder %s19, 1
    %p126 = por %p124, %p125
    %p128 = scmp.ne.s32.totalorder %s113, %s127
    %p129 = scmp.eq.s32.totalorder %s19, 0
    %p130 = por %p128, %p129
    %s132 = sadd.s32 %s131, 1
    %p135 = scmp.eq.s32.totalorder %s13, 1
    %p136 = scmp.ne.s32.totalorder %s131, %s133
    %p137 = scmp.eq.s32.totalorder %s13, 0
    %p138 = por %p136, %p137
    %p139 = scmp.ne.s32.totalorder %s131, %s133
    %p140 = scmp.eq.s32.totalorder %s18, 1
    %p141 = por %p139, %p140
    %p142 = scmp.ne.s32.totalorder %s133, %s134
    %p143 = scmp.eq.s32.totalorder %s18, 0
    %p144 = por %p142, %p143
    %p145 = scmp.ne.s32.totalorder %s133, %s134
    %p146 = scmp.eq.s32.totalorder %s19, 1
    %p147 = por %p145, %p146
    %p149 = scmp.ne.s32.totalorder %s134, %s148
    %p150 = scmp.eq.s32.totalorder %s19, 0
    %p151 = por %p149, %p150
    %s152 = ssub.s32 %s13, %s20
    %p153 = scmp.eq.s32.totalorder %s152, 0
    %s155 = sadd.s32 %s154, 1
    %s156 = scalar_select %p153, %s154, %s155
    %p159 = pneg %p153
    %p160 = scmp.eq.s32.totalorder %s13, 1
    %p161 = por %p159, %p160
    %p162 = scmp.ne.s32.totalorder %s154, %s157
    %p163 = scmp.eq.s32.totalorder %s13, 0
    %p164 = por %p162, %p163
    %p165 = scmp.ne.s32.totalorder %s154, %s157
    %p166 = scmp.eq.s32.totalorder %s18, 1
    %p167 = por %p165, %p166
    %p168 = scmp.ne.s32.totalorder %s157, %s158
    %p169 = scmp.eq.s32.totalorder %s18, 0
    %p170 = por %p168, %p169
    %p171 = scmp.ne.s32.totalorder %s157, %s158
    %p172 = scmp.eq.s32.totalorder %s19, 1
    %p173 = por %p171, %p172
    %p175 = scmp.ne.s32.totalorder %s158, %s174
    %p176 = scmp.eq.s32.totalorder %s19, 0
    %p177 = por %p175, %p176
    %p178 = scmp.le.s32.totalorder 1, %s13
    %p179 = scmp.lt.s32.totalorder %s13, 3
    %p180 = pnand %p178, %p179
    %p181 = pneg %p180
    // Predicated region
    $region9: #{dcr_block.1} parent=5 // pred_check
      _
    $region10: #{dcr_block.1} parent=5 // pred_check_branch
      %183 = sbr.rel (%p180) target = $region12
    $region11: #{dcr_block.1} parent=5 // pred_region
      %s184 = ssub.s32 %s13, 1
      // Predicated region
      $region13: #{dcr_block.1} parent=11 // pred_check
        %p185 = pneg %p60
      $region14: #{dcr_block.1} parent=11 // pred_check_branch
        %187 = sbr.rel (%p185) target = $region16
      $region15: #{dcr_block.1} parent=11 // pred_region
        _
      $region16: #{dcr_block.1} parent=11 // pred_fallthru
        _
      // Predicated region
      $region17: #{dcr_block.1} parent=11 // pred_check
        %p188 = pneg %p81
      $region18: #{dcr_block.1} parent=11 // pred_check_branch
        %190 = sbr.rel (%p188) target = $region20
      $region19: #{dcr_block.1} parent=11 // pred_region
        _
      $region20: #{dcr_block.1} parent=11 // pred_fallthru
        _
      // Predicated region
      $region21: #{dcr_block.1} parent=11 // pred_check
        %p191 = pneg %p102
      $region22: #{dcr_block.1} parent=11 // pred_check_branch
        %193 = sbr.rel (%p191) target = $region24
      $region23: #{dcr_block.1} parent=11 // pred_region
        _
      $region24: #{dcr_block.1} parent=11 // pred_fallthru
        _
      // Predicated region
      $region25: #{dcr_block.1} parent=11 // pred_check
        %p194 = pneg %p123
      $region26: #{dcr_block.1} parent=11 // pred_check_branch
        %196 = sbr.rel (%p194) target = $region28
      $region27: #{dcr_block.1} parent=11 // pred_region
        _
      $region28: #{dcr_block.1} parent=11 // pred_fallthru
        _
      // Predicated region
      $region29: #{dcr_block.1} parent=11 // pred_check
        %p197 = pneg %p144
      $region30: #{dcr_block.1} parent=11 // pred_check_branch
        %199 = sbr.rel (%p197) target = $region32
      $region31: #{dcr_block.1} parent=11 // pred_region
        _
      $region32: #{dcr_block.1} parent=11 // pred_fallthru
        _
    $region12: #{dcr_block.1} parent=5 // pred_fallthru
      _
    %p200 = scmp.lt.s32.totalorder %s13, 2
    // Predicated region
    $region33: #{dcr_block.1} parent=5 // pred_check
      %p201 = pneg %p200
    $region34: #{dcr_block.1} parent=5 // pred_check_branch
      %203 = sbr.rel (%p201) target = $region36
    $region35: #{dcr_block.1} parent=5 // pred_region
      // Predicated region
      $region37: #{dcr_block.1} parent=35 // pred_check
        %p204 = pneg %p33
      $region38: #{dcr_block.1} parent=35 // pred_check_branch
        %206 = sbr.rel (%p204) target = $region40
      $region39: #{dcr_block.1} parent=35 // pred_region
        %p207 = scmp.lt.s32.totalorder %s13, 1
        %s208 = scalar_select %p207, %s13, 1
        %s209 = smul.addr %s208, 8
        %s210 = scalar_lea.vmem %s0, %s209
      $region40: #{dcr_block.1} parent=35 // pred_fallthru
        _
    $region36: #{dcr_block.1} parent=5 // pred_fallthru
      _
    %p211 = scmp.le.s32.totalorder 1, %s13
    %p212 = scmp.lt.s32.totalorder %s13, 3
    %p213 = pnand %p211, %p212
    %p214 = pneg %p213
    // Predicated region
    $region41: #{dcr_block.1} parent=5 // pred_check
      _
    $region42: #{dcr_block.1} parent=5 // pred_check_branch
      %216 = sbr.rel (%p213) target = $region44
    $region43: #{dcr_block.1} parent=5 // pred_region
      %s217 = ssub.s32 %s13, 1
      %p218 = scmp.lt.s32.totalorder %s18, 1
      %s219 = scalar_select %p218, %s18, 1
      %s220 = smul.addr %s219, 8
      %s221 = scalar_lea.vmem %s0, %s220
      %p222 = pneg %p39
      %p223 = pneg %p36
      %p224 = pneg %p60
      %p225 = pneg %p57
      %p226 = pneg %p81
      %p227 = pneg %p78
      %p228 = pneg %p102
      %p229 = pneg %p99
      %p230 = pneg %p123
      %p231 = pneg %p120
      %p232 = pneg %p144
      %p233 = pneg %p141
      %p234 = pneg %p170
      %p235 = pneg %p167
      %p236 = scmp.lt.s32.totalorder %s18, 1
      %s237 = scalar_select %p236, %s18, 1
      %s238 = smul.addr %s237, 8
      %s239 = scalar_lea.vmem %s6, %s238
      %p240 = scmp.lt.s32.totalorder %s18, 1
      %s241 = scalar_select %p240, %s18, 1
      %s242 = smul.addr %s241, 8
      %s243 = scalar_lea.vmem %s0, %s242
      %p244 = scmp.lt.s32.totalorder %s18, 1
      %s245 = scalar_select %p244, %s18, 1
      %s246 = smul.addr %s245, 8
      %s247 = scalar_lea.vmem %s6, %s246
      %v248 = vld [vmem:[%s243] sm:$0xff]
      %v249 = vlaneseq
      %v250 = vshrl.u32 %v249, 7
      %v251 = vlaneseq
      %v252 = vand.u32 %v251, 127
      %v253 = vsub.s32 %v250, 1
      %vm254 = vcmp.eq.s32.totalorder %v252, %v253
      %v255 = vsel %vm254, 1, 0
      %v256 = vcvt.s32.f32 %v255
      %v257 = vadd.s32 %v250, 1
      %vm258 = vcmp.eq.s32.totalorder %v252, %v257
      %v259 = vsel %vm258, 1, 0
      %v260 = vcvt.s32.f32 %v259
      %s261 = sld [smem:[#allocation2]]
      %v262 = vld [vmem:[%s1] sm:$0xff]
      %v263 = vld [vmem:[%s1 + $0x8] sm:$0xff]
      %v264 = vld [vmem:[%s1 + $0x10] sm:$0xff]
      %v265 = vld [vmem:[%s1 + $0x18] sm:$0xff]
      %v266 = vld [vmem:[%s1 + $0x20] sm:$0xff]
      %v267 = vld [vmem:[%s1 + $0x28] sm:$0xff]
      %v268 = vld [vmem:[%s1 + $0x30] sm:$0xff]
      %v269 = vld [vmem:[%s1 + $0x38] sm:$0xff]
      %v270 = vld [vmem:[%s1 + $0x40] sm:$0xff]
      %v271 = vld [vmem:[%s1 + $0x48] sm:$0xff]
      %v272 = vld [vmem:[%s1 + $0x50] sm:$0xff]
      %v273 = vld [vmem:[%s1 + $0x58] sm:$0xff]
      %v274 = vld [vmem:[%s1 + $0x60] sm:$0xff]
      %v275 = vld [vmem:[%s1 + $0x68] sm:$0xff]
      %v276 = vld [vmem:[%s1 + $0x70] sm:$0xff]
      %v277 = vld [vmem:[%s1 + $0x78] sm:$0xff]
      %278 = vmatprep.subr.mxu0 0.0
      %279 = vmatpush1.msra.mxu0 %v277
      %280 = vmatprep.subr.mxu0 0.0
      %281 = vmatpush1.msra.mxu0 %v276
      %282 = vmatprep.subr.mxu0 0.0
      %283 = vmatpush1.msra.mxu0 %v275
      %284 = vmatprep.subr.mxu0 0.0
      %285 = vmatpush1.msra.mxu0 %v274
      %286 = vmatprep.subr.mxu0 0.0
      %287 = vmatpush1.msra.mxu0 %v273
      %288 = vmatprep.subr.mxu0 0.0
      %289 = vmatpush1.msra.mxu0 %v272
      %290 = vmatprep.subr.mxu0 0.0
      %291 = vmatpush1.msra.mxu0 %v271
      %292 = vmatprep.subr.mxu0 0.0
      %293 = vmatpush1.msra.mxu0 %v270
      %294 = vmatprep.subr.mxu0 0.0
      %295 = vmatpush1.msra.mxu0 %v269
      %296 = vmatprep.subr.mxu0 0.0
      %297 = vmatpush1.msra.mxu0 %v268
      %298 = vmatprep.subr.mxu0 0.0
      %299 = vmatpush1.msra.mxu0 %v267
      %300 = vmatprep.subr.mxu0 0.0
      %301 = vmatpush1.msra.mxu0 %v266
      %302 = vmatprep.subr.mxu0 0.0
      %303 = vmatpush1.msra.mxu0 %v265
      %304 = vmatprep.subr.mxu0 0.0
      %305 = vmatpush1.msra.mxu0 %v264
      %306 = vmatprep.subr.mxu0 0.0
      %307 = vmatpush1.msra.mxu0 %v263
      %308 = vmatprep.subr.mxu0 0.0
      %309 = vmatpush1.msra.mxu0 %v262
      %310 = vmatprep.subr.mxu0 0.0
      %311 = vmatpush2.msra.mxu0 0.0
      %312 = vmatprep.subr.mxu0 0.0
      %313 = vmatpush2.msra.mxu0 0.0
      %314 = vmatprep.subr.mxu0 0.0
      %315 = vmatpush2.msra.mxu0 0.0
      %316 = vmatprep.subr.mxu0 0.0
      %317 = vmatpush2.msra.mxu0 0.0
      %318 = vmatprep.subr.mxu0 0.0
      %319 = vmatpush2.msra.mxu0 0.0
      %320 = vmatprep.subr.mxu0 0.0
      %321 = vmatpush2.msra.mxu0 0.0
      %322 = vmatprep.subr.mxu0 0.0
      %323 = vmatpush2.msra.mxu0 0.0
      %324 = vmatprep.subr.mxu0 0.0
      %325 = vmatpush2.msra.mxu0 0.0
      %326 = vmatprep.subr.mxu0 0.0
      %327 = vmatpush2.msra.mxu0 0.0
      %328 = vmatprep.subr.mxu0 0.0
      %329 = vmatpush2.msra.mxu0 0.0
      %330 = vmatprep.subr.mxu0 0.0
      %331 = vmatpush2.msra.mxu0 0.0
      %332 = vmatprep.subr.mxu0 0.0
      %333 = vmatpush2.msra.mxu0 0.0
      %334 = vmatprep.subr.mxu0 0.0
      %335 = vmatpush2.msra.mxu0 0.0
      %336 = vmatprep.subr.mxu0 0.0
      %337 = vmatpush2.msra.mxu0 0.0
      %338 = vmatprep.subr.mxu0 0.0
      %339 = vmatpush2.msra.mxu0 0.0
      %340 = vmatprep.subr.mxu0 0.0
      %341 = vmatpush2.msra.mxu0 0.0
      %342 = vmatprep.mubr.f32.mxu0 0.0
      %343 = vmatmul.mubr.f32.gmra.mxu0 %v248
      %v344 = vpop.f32.mrf.mxu0
      %v345 = vadd.f32 0.0, %v344
      %v346 = vpop.f32.mrf.mxu0
      %347 = vdwg.mxu0
      %s348 = scalar_lea.vmem %s1, 128
      %v349 = vld [vmem:[%s348] sm:$0xff]
      %v350 = vld [vmem:[%s348 + $0x8] sm:$0xff]
      %v351 = vld [vmem:[%s348 + $0x10] sm:$0xff]
      %v352 = vld [vmem:[%s348 + $0x18] sm:$0xff]
      %v353 = vld [vmem:[%s348 + $0x20] sm:$0xff]
      %v354 = vld [vmem:[%s348 + $0x28] sm:$0xff]
      %v355 = vld [vmem:[%s348 + $0x30] sm:$0xff]
      %v356 = vld [vmem:[%s348 + $0x38] sm:$0xff]
      %v357 = vld [vmem:[%s348 + $0x40] sm:$0xff]
      %v358 = vld [vmem:[%s348 + $0x48] sm:$0xff]
      %v359 = vld [vmem:[%s348 + $0x50] sm:$0xff]
      %v360 = vld [vmem:[%s348 + $0x58] sm:$0xff]
      %v361 = vld [vmem:[%s348 + $0x60] sm:$0xff]
      %v362 = vld [vmem:[%s348 + $0x68] sm:$0xff]
      %v363 = vld [vmem:[%s348 + $0x70] sm:$0xff]
      %v364 = vld [vmem:[%s348 + $0x78] sm:$0xff]
      %s365 = scalar_lea.vmem %s1, 256
      %v366 = vld [vmem:[%s365] sm:$0xff]
      %v367 = vld [vmem:[%s365 + $0x8] sm:$0xff]
      %v368 = vld [vmem:[%s365 + $0x10] sm:$0xff]
      %v369 = vld [vmem:[%s365 + $0x18] sm:$0xff]
      %v370 = vld [vmem:[%s365 + $0x20] sm:$0xff]
      %v371 = vld [vmem:[%s365 + $0x28] sm:$0xff]
      %v372 = vld [vmem:[%s365 + $0x30] sm:$0xff]
      %v373 = vld [vmem:[%s365 + $0x38] sm:$0xff]
      %v374 = vld [vmem:[%s365 + $0x40] sm:$0xff]
      %v375 = vld [vmem:[%s365 + $0x48] sm:$0xff]
      %v376 = vld [vmem:[%s365 + $0x50] sm:$0xff]
      %v377 = vld [vmem:[%s365 + $0x58] sm:$0xff]
      %v378 = vld [vmem:[%s365 + $0x60] sm:$0xff]
      %v379 = vld [vmem:[%s365 + $0x68] sm:$0xff]
      %v380 = vld [vmem:[%s365 + $0x70] sm:$0xff]
      %v381 = vld [vmem:[%s365 + $0x78] sm:$0xff]
      %382 = vmatprep.subr.mxu0 0.0
      %383 = vmatpush1.msra.mxu0 %v381
      %384 = vmatprep.subr.mxu0 0.0
      %385 = vmatpush1.msra.mxu0 %v380
      %386 = vmatprep.subr.mxu0 0.0
      %387 = vmatpush1.msra.mxu0 %v379
      %388 = vmatprep.subr.mxu0 0.0
      %389 = vmatpush1.msra.mxu0 %v378
      %390 = vmatprep.subr.mxu0 0.0
      %391 = vmatpush1.msra.mxu0 %v377
      %392 = vmatprep.subr.mxu0 0.0
      %393 = vmatpush1.msra.mxu0 %v376
      %394 = vmatprep.subr.mxu0 0.0
      %395 = vmatpush1.msra.mxu0 %v375
      %396 = vmatprep.subr.mxu0 0.0
      %397 = vmatpush1.msra.mxu0 %v374
      %398 = vmatprep.subr.mxu0 0.0
      %399 = vmatpush1.msra.mxu0 %v373
      %400 = vmatprep.subr.mxu0 0.0
      %401 = vmatpush1.msra.mxu0 %v372
      %402 = vmatprep.subr.mxu0 0.0
      %403 = vmatpush1.msra.mxu0 %v371
      %404 = vmatprep.subr.mxu0 0.0
      %405 = vmatpush1.msra.mxu0 %v370
      %406 = vmatprep.subr.mxu0 0.0
      %407 = vmatpush1.msra.mxu0 %v369
      %408 = vmatprep.subr.mxu0 0.0
      %409 = vmatpush1.msra.mxu0 %v368
      %410 = vmatprep.subr.mxu0 0.0
      %411 = vmatpush1.msra.mxu0 %v367
      %412 = vmatprep.subr.mxu0 0.0
      %413 = vmatpush1.msra.mxu0 %v366
      %414 = vmatprep.subr.mxu0 0.0
      %415 = vmatpush2.msra.mxu0 0.0
      %416 = vmatprep.subr.mxu0 0.0
      %417 = vmatpush2.msra.mxu0 0.0
      %418 = vmatprep.subr.mxu0 0.0
      %419 = vmatpush2.msra.mxu0 0.0
      %420 = vmatprep.subr.mxu0 0.0
      %421 = vmatpush2.msra.mxu0 0.0
      %422 = vmatprep.subr.mxu0 0.0
      %423 = vmatpush2.msra.mxu0 0.0
      %424 = vmatprep.subr.mxu0 0.0
      %425 = vmatpush2.msra.mxu0 0.0
      %426 = vmatprep.subr.mxu0 0.0
      %427 = vmatpush2.msra.mxu0 0.0
      %428 = vmatprep.subr.mxu0 0.0
      %429 = vmatpush2.msra.mxu0 0.0
      %430 = vmatprep.subr.mxu0 0.0
      %431 = vmatpush2.msra.mxu0 0.0
      %432 = vmatprep.subr.mxu0 0.0
      %433 = vmatpush2.msra.mxu0 0.0
      %434 = vmatprep.subr.mxu0 0.0
      %435 = vmatpush2.msra.mxu0 0.0
      %436 = vmatprep.subr.mxu0 0.0
      %437 = vmatpush2.msra.mxu0 0.0
      %438 = vmatprep.subr.mxu0 0.0
      %439 = vmatpush2.msra.mxu0 0.0
      %440 = vmatprep.subr.mxu0 0.0
      %441 = vmatpush2.msra.mxu0 0.0
      %442 = vmatprep.subr.mxu0 0.0
      %443 = vmatpush2.msra.mxu0 0.0
      %444 = vmatprep.subr.mxu0 0.0
      %445 = vmatpush2.msra.mxu0 0.0
      %446 = vmatprep.mubr.f32.mxu0 0.0
      %447 = vmatmul.mubr.f32.gmra.mxu0 %v248
      %v448 = vpop.f32.mrf.mxu0
      %v449 = vadd.f32 0.0, %v448
      %v450 = vpop.f32.mrf.mxu0
      %451 = vdwg.mxu0
      %vm452 = vcmask 64512
      %v454 = vsel %vm452, %v256, 0
      %456 = vmatprep.subr.mxu0 0.0
      %457 = vmatpush1.msra.mxu0 0.0
      %458 = vmatprep.subr.mxu0 0.0
      %459 = vmatpush1.msra.mxu0 0.0
      %460 = vmatprep.subr.mxu0 0.0
      %461 = vmatpush1.msra.mxu0 0.0
      %462 = vmatprep.subr.mxu0 0.0
      %463 = vmatpush1.msra.mxu0 0.0
      %464 = vmatprep.subr.mxu0 0.0
      %465 = vmatpush1.msra.mxu0 0.0
      %466 = vmatprep.subr.mxu0 0.0
      %467 = vmatpush1.msra.mxu0 0.0
      %468 = vmatprep.subr.mxu0 0.0
      %469 = vmatpush1.msra.mxu0 0.0
      %470 = vmatprep.subr.mxu0 0.0
      %471 = vmatpush1.msra.mxu0 0.0
      %472 = vmatprep.subr.mxu0 0.0
      %473 = vmatpush1.msra.mxu0 0.0
      %474 = vmatprep.subr.mxu0 0.0
      %475 = vmatpush1.msra.mxu0 0.0
      %476 = vmatprep.subr.mxu0 0.0
      %477 = vmatpush1.msra.mxu0 0.0
      %478 = vmatprep.subr.mxu0 0.0
      %479 = vmatpush1.msra.mxu0 0.0
      %480 = vmatprep.subr.mxu0 0.0
      %481 = vmatpush1.msra.mxu0 0.0
      %482 = vmatprep.subr.mxu0 0.0
      %483 = vmatpush1.msra.mxu0 0.0
      %484 = vmatprep.subr.mxu0 0.0
      %485 = vmatpush1.msra.mxu0 0.0
      %486 = vmatprep.subr.mxu0 0.0
      %487 = vmatpush1.msra.mxu0 %v345
      %488 = vmatprep.subr.mxu0 0.0
      %489 = vmatpush2.msra.mxu0 0.0
      %490 = vmatprep.subr.mxu0 0.0
      %491 = vmatpush2.msra.mxu0 0.0
      %492 = vmatprep.subr.mxu0 0.0
      %493 = vmatpush2.msra.mxu0 0.0
      %494 = vmatprep.subr.mxu0 0.0
      %495 = vmatpush2.msra.mxu0 0.0
      %496 = vmatprep.subr.mxu0 0.0
      %497 = vmatpush2.msra.mxu0 0.0
      %498 = vmatprep.subr.mxu0 0.0
      %499 = vmatpush2.msra.mxu0 0.0
      %500 = vmatprep.subr.mxu0 0.0
      %501 = vmatpush2.msra.mxu0 0.0
      %502 = vmatprep.subr.mxu0 0.0
      %503 = vmatpush2.msra.mxu0 0.0
      %504 = vmatprep.subr.mxu0 0.0
      %505 = vmatpush2.msra.mxu0 0.0
      %506 = vmatprep.subr.mxu0 0.0
      %507 = vmatpush2.msra.mxu0 0.0
      %508 = vmatprep.subr.mxu0 0.0
      %509 = vmatpush2.msra.mxu0 0.0
      %510 = vmatprep.subr.mxu0 0.0
      %511 = vmatpush2.msra.mxu0 0.0
      %512 = vmatprep.subr.mxu0 0.0
      %513 = vmatpush2.msra.mxu0 0.0
      %514 = vmatprep.subr.mxu0 0.0
      %515 = vmatpush2.msra.mxu0 0.0
      %516 = vmatprep.subr.mxu0 0.0
      %517 = vmatpush2.msra.mxu0 0.0
      %518 = vmatprep.subr.mxu0 0.0
      %519 = vmatpush2.msra.mxu0 0.0
      %520 = vmatprep.mubr.f32.mxu0 0.0
      %521 = vmatmul.mubr.f32.gmra.mxu0 %v454
      %v522 = vpop.f32.mrf.mxu0
      %v523 = vadd.f32 0.0, %v522
      %v524 = vpop.f32.mrf.mxu0
      %525 = vdwg.mxu0
      %526 = vmatprep.subr.mxu0 0.0
      %527 = vmatpush1.msra.mxu0 %v364
      %528 = vmatprep.subr.mxu0 0.0
      %529 = vmatpush1.msra.mxu0 %v363
      %530 = vmatprep.subr.mxu0 0.0
      %531 = vmatpush1.msra.mxu0 %v362
      %532 = vmatprep.subr.mxu0 0.0
      %533 = vmatpush1.msra.mxu0 %v361
      %534 = vmatprep.subr.mxu0 0.0
      %535 = vmatpush1.msra.mxu0 %v360
      %536 = vmatprep.subr.mxu0 0.0
      %537 = vmatpush1.msra.mxu0 %v359
      %538 = vmatprep.subr.mxu0 0.0
      %539 = vmatpush1.msra.mxu0 %v358
      %540 = vmatprep.subr.mxu0 0.0
      %541 = vmatpush1.msra.mxu0 %v357
      %542 = vmatprep.subr.mxu0 0.0
      %543 = vmatpush1.msra.mxu0 %v356
      %544 = vmatprep.subr.mxu0 0.0
      %545 = vmatpush1.msra.mxu0 %v355
      %546 = vmatprep.subr.mxu0 0.0
      %547 = vmatpush1.msra.mxu0 %v354
      %548 = vmatprep.subr.mxu0 0.0
      %549 = vmatpush1.msra.mxu0 %v353
      %550 = vmatprep.subr.mxu0 0.0
      %551 = vmatpush1.msra.mxu0 %v352
      %552 = vmatprep.subr.mxu0 0.0
      %553 = vmatpush1.msra.mxu0 %v351
      %554 = vmatprep.subr.mxu0 0.0
      %555 = vmatpush1.msra.mxu0 %v350
      %556 = vmatprep.subr.mxu0 0.0
      %557 = vmatpush1.msra.mxu0 %v349
      %558 = vmatprep.subr.mxu0 0.0
      %559 = vmatpush2.msra.mxu0 0.0
      %560 = vmatprep.subr.mxu0 0.0
      %561 = vmatpush2.msra.mxu0 0.0
      %562 = vmatprep.subr.mxu0 0.0
      %563 = vmatpush2.msra.mxu0 0.0
      %564 = vmatprep.subr.mxu0 0.0
      %565 = vmatpush2.msra.mxu0 0.0
      %566 = vmatprep.subr.mxu0 0.0
      %567 = vmatpush2.msra.mxu0 0.0
      %568 = vmatprep.subr.mxu0 0.0
      %569 = vmatpush2.msra.mxu0 0.0
      %570 = vmatprep.subr.mxu0 0.0
      %571 = vmatpush2.msra.mxu0 0.0
      %572 = vmatprep.subr.mxu0 0.0
      %573 = vmatpush2.msra.mxu0 0.0
      %574 = vmatprep.subr.mxu0 0.0
      %575 = vmatpush2.msra.mxu0 0.0
      %576 = vmatprep.subr.mxu0 0.0
      %577 = vmatpush2.msra.mxu0 0.0
      %578 = vmatprep.subr.mxu0 0.0
      %579 = vmatpush2.msra.mxu0 0.0
      %580 = vmatprep.subr.mxu0 0.0
      %581 = vmatpush2.msra.mxu0 0.0
      %582 = vmatprep.subr.mxu0 0.0
      %583 = vmatpush2.msra.mxu0 0.0
      %584 = vmatprep.subr.mxu0 0.0
      %585 = vmatpush2.msra.mxu0 0.0
      %586 = vmatprep.subr.mxu0 0.0
      %587 = vmatpush2.msra.mxu0 0.0
      %588 = vmatprep.subr.mxu0 0.0
      %589 = vmatpush2.msra.mxu0 0.0
      %590 = vmatprep.mubr.f32.mxu0 0.0
      %591 = vmatmul.mubr.f32.gmra.mxu0 %v248
      %v592 = vpop.f32.mrf.mxu0
      %v593 = vadd.f32 %v523, %v592
      %v594 = vpop.f32.mrf.mxu0
      %595 = vdwg.mxu0
      %v597 = vsel %vm452, %v260, 0
      %599 = vmatprep.subr.mxu0 0.0
      %600 = vmatpush1.msra.mxu0 0.0
      %601 = vmatprep.subr.mxu0 0.0
      %602 = vmatpush1.msra.mxu0 0.0
      %603 = vmatprep.subr.mxu0 0.0
      %604 = vmatpush1.msra.mxu0 0.0
      %605 = vmatprep.subr.mxu0 0.0
      %606 = vmatpush1.msra.mxu0 0.0
      %607 = vmatprep.subr.mxu0 0.0
      %608 = vmatpush1.msra.mxu0 0.0
      %609 = vmatprep.subr.mxu0 0.0
      %610 = vmatpush1.msra.mxu0 0.0
      %611 = vmatprep.subr.mxu0 0.0
      %612 = vmatpush1.msra.mxu0 0.0
      %613 = vmatprep.subr.mxu0 0.0
      %614 = vmatpush1.msra.mxu0 0.0
      %615 = vmatprep.subr.mxu0 0.0
      %616 = vmatpush1.msra.mxu0 0.0
      %617 = vmatprep.subr.mxu0 0.0
      %618 = vmatpush1.msra.mxu0 0.0
      %619 = vmatprep.subr.mxu0 0.0
      %620 = vmatpush1.msra.mxu0 0.0
      %621 = vmatprep.subr.mxu0 0.0
      %622 = vmatpush1.msra.mxu0 0.0
      %623 = vmatprep.subr.mxu0 0.0
      %624 = vmatpush1.msra.mxu0 0.0
      %625 = vmatprep.subr.mxu0 0.0
      %626 = vmatpush1.msra.mxu0 0.0
      %627 = vmatprep.subr.mxu0 0.0
      %628 = vmatpush1.msra.mxu0 0.0
      %629 = vmatprep.subr.mxu0 0.0
      %630 = vmatpush1.msra.mxu0 %v449
      %631 = vmatprep.subr.mxu0 0.0
      %632 = vmatpush2.msra.mxu0 0.0
      %633 = vmatprep.subr.mxu0 0.0
      %634 = vmatpush2.msra.mxu0 0.0
      %635 = vmatprep.subr.mxu0 0.0
      %636 = vmatpush2.msra.mxu0 0.0
      %637 = vmatprep.subr.mxu0 0.0
      %638 = vmatpush2.msra.mxu0 0.0
      %639 = vmatprep.subr.mxu0 0.0
      %640 = vmatpush2.msra.mxu0 0.0
      %641 = vmatprep.subr.mxu0 0.0
      %642 = vmatpush2.msra.mxu0 0.0
      %643 = vmatprep.subr.mxu0 0.0
      %644 = vmatpush2.msra.mxu0 0.0
      %645 = vmatprep.subr.mxu0 0.0
      %646 = vmatpush2.msra.mxu0 0.0
      %647 = vmatprep.subr.mxu0 0.0
      %648 = vmatpush2.msra.mxu0 0.0
      %649 = vmatprep.subr.mxu0 0.0
      %650 = vmatpush2.msra.mxu0 0.0
      %651 = vmatprep.subr.mxu0 0.0
      %652 = vmatpush2.msra.mxu0 0.0
      %653 = vmatprep.subr.mxu0 0.0
      %654 = vmatpush2.msra.mxu0 0.0
      %655 = vmatprep.subr.mxu0 0.0
      %656 = vmatpush2.msra.mxu0 0.0
      %657 = vmatprep.subr.mxu0 0.0
      %658 = vmatpush2.msra.mxu0 0.0
      %659 = vmatprep.subr.mxu0 0.0
      %660 = vmatpush2.msra.mxu0 0.0
      %661 = vmatprep.subr.mxu0 0.0
      %662 = vmatpush2.msra.mxu0 0.0
      %663 = vmatprep.mubr.f32.mxu0 0.0
      %664 = vmatmul.mubr.f32.gmra.mxu0 %v597
      %v665 = vpop.f32.mrf.mxu0
      %v666 = vadd.f32 0.0, %v665
      %v667 = vpop.f32.mrf.mxu0
      %668 = vdwg.mxu0
      %v669 = vadd.f32 %v593, %v666
      %v670 = vld [vmem:[%s2] sm:$0x1]
      %v672 = vlaneseq
      %v673 = vshrl.u32 %v672, 7
      %v674 = vsub.s32 0, %v673
      %v675 = vrot.slane %v670, %v674
      %v677 = vadd.f32 %v669, %v675
      %vm678 = vcmp.ge.f32.partialorder %v677, 0.0
      %v679 = vstv %s261
      %v680 = vmul.f32 %v679, %v677
      %v681 = vsel %vm678, %v677, %v680
      %v682 = vld [vmem:[%s3] sm:$0xff]
      %v683 = vld [vmem:[%s3 + $0x8] sm:$0xff]
      %v684 = vld [vmem:[%s3 + $0x10] sm:$0xff]
      %v685 = vld [vmem:[%s3 + $0x18] sm:$0xff]
      %v686 = vld [vmem:[%s3 + $0x20] sm:$0xff]
      %v687 = vld [vmem:[%s3 + $0x28] sm:$0xff]
      %v688 = vld [vmem:[%s3 + $0x30] sm:$0xff]
      %v689 = vld [vmem:[%s3 + $0x38] sm:$0xff]
      %v690 = vld [vmem:[%s3 + $0x40] sm:$0xff]
      %v691 = vld [vmem:[%s3 + $0x48] sm:$0xff]
      %v692 = vld [vmem:[%s3 + $0x50] sm:$0xff]
      %v693 = vld [vmem:[%s3 + $0x58] sm:$0xff]
      %v694 = vld [vmem:[%s3 + $0x60] sm:$0xff]
      %v695 = vld [vmem:[%s3 + $0x68] sm:$0xff]
      %v696 = vld [vmem:[%s3 + $0x70] sm:$0xff]
      %v697 = vld [vmem:[%s3 + $0x78] sm:$0xff]
      %698 = vmatprep.subr.mxu0 0.0
      %699 = vmatpush1.msra.mxu0 %v697
      %700 = vmatprep.subr.mxu0 0.0
      %701 = vmatpush1.msra.mxu0 %v696
      %702 = vmatprep.subr.mxu0 0.0
      %703 = vmatpush1.msra.mxu0 %v695
      %704 = vmatprep.subr.mxu0 0.0
      %705 = vmatpush1.msra.mxu0 %v694
      %706 = vmatprep.subr.mxu0 0.0
      %707 = vmatpush1.msra.mxu0 %v693
      %708 = vmatprep.subr.mxu0 0.0
      %709 = vmatpush1.msra.mxu0 %v692
      %710 = vmatprep.subr.mxu0 0.0
      %711 = vmatpush1.msra.mxu0 %v691
      %712 = vmatprep.subr.mxu0 0.0
      %713 = vmatpush1.msra.mxu0 %v690
      %714 = vmatprep.subr.mxu0 0.0
      %715 = vmatpush1.msra.mxu0 %v689
      %716 = vmatprep.subr.mxu0 0.0
      %717 = vmatpush1.msra.mxu0 %v688
      %718 = vmatprep.subr.mxu0 0.0
      %719 = vmatpush1.msra.mxu0 %v687
      %720 = vmatprep.subr.mxu0 0.0
      %721 = vmatpush1.msra.mxu0 %v686
      %722 = vmatprep.subr.mxu0 0.0
      %723 = vmatpush1.msra.mxu0 %v685
      %724 = vmatprep.subr.mxu0 0.0
      %725 = vmatpush1.msra.mxu0 %v684
      %726 = vmatprep.subr.mxu0 0.0
      %727 = vmatpush1.msra.mxu0 %v683
      %728 = vmatprep.subr.mxu0 0.0
      %729 = vmatpush1.msra.mxu0 %v682
      %730 = vmatprep.subr.mxu0 0.0
      %731 = vmatpush2.msra.mxu0 0.0
      %732 = vmatprep.subr.mxu0 0.0
      %733 = vmatpush2.msra.mxu0 0.0
      %734 = vmatprep.subr.mxu0 0.0
      %735 = vmatpush2.msra.mxu0 0.0
      %736 = vmatprep.subr.mxu0 0.0
      %737 = vmatpush2.msra.mxu0 0.0
      %738 = vmatprep.subr.mxu0 0.0
      %739 = vmatpush2.msra.mxu0 0.0
      %740 = vmatprep.subr.mxu0 0.0
      %741 = vmatpush2.msra.mxu0 0.0
      %742 = vmatprep.subr.mxu0 0.0
      %743 = vmatpush2.msra.mxu0 0.0
      %744 = vmatprep.subr.mxu0 0.0
      %745 = vmatpush2.msra.mxu0 0.0
      %746 = vmatprep.subr.mxu0 0.0
      %747 = vmatpush2.msra.mxu0 0.0
      %748 = vmatprep.subr.mxu0 0.0
      %749 = vmatpush2.msra.mxu0 0.0
      %750 = vmatprep.subr.mxu0 0.0
      %751 = vmatpush2.msra.mxu0 0.0
      %752 = vmatprep.subr.mxu0 0.0
      %753 = vmatpush2.msra.mxu0 0.0
      %754 = vmatprep.subr.mxu0 0.0
      %755 = vmatpush2.msra.mxu0 0.0
      %756 = vmatprep.subr.mxu0 0.0
      %757 = vmatpush2.msra.mxu0 0.0
      %758 = vmatprep.subr.mxu0 0.0
      %759 = vmatpush2.msra.mxu0 0.0
      %760 = vmatprep.subr.mxu0 0.0
      %761 = vmatpush2.msra.mxu0 0.0
      %762 = vmatprep.mubr.f32.mxu0 0.0
      %763 = vmatmul.mubr.f32.gmra.mxu0 %v681
      %v764 = vpop.f32.mrf.mxu0
      %v765 = vadd.f32 0.0, %v764
      %v766 = vpop.f32.mrf.mxu0
      %767 = vdwg.mxu0
      %s768 = scalar_lea.vmem %s3, 128
      %v769 = vld [vmem:[%s768] sm:$0xff]
      %v770 = vld [vmem:[%s768 + $0x8] sm:$0xff]
      %v771 = vld [vmem:[%s768 + $0x10] sm:$0xff]
      %v772 = vld [vmem:[%s768 + $0x18] sm:$0xff]
      %v773 = vld [vmem:[%s768 + $0x20] sm:$0xff]
      %v774 = vld [vmem:[%s768 + $0x28] sm:$0xff]
      %v775 = vld [vmem:[%s768 + $0x30] sm:$0xff]
      %v776 = vld [vmem:[%s768 + $0x38] sm:$0xff]
      %v777 = vld [vmem:[%s768 + $0x40] sm:$0xff]
      %v778 = vld [vmem:[%s768 + $0x48] sm:$0xff]
      %v779 = vld [vmem:[%s768 + $0x50] sm:$0xff]
      %v780 = vld [vmem:[%s768 + $0x58] sm:$0xff]
      %v781 = vld [vmem:[%s768 + $0x60] sm:$0xff]
      %v782 = vld [vmem:[%s768 + $0x68] sm:$0xff]
      %v783 = vld [vmem:[%s768 + $0x70] sm:$0xff]
      %v784 = vld [vmem:[%s768 + $0x78] sm:$0xff]
      %s785 = scalar_lea.vmem %s3, 256
      %v786 = vld [vmem:[%s785] sm:$0xff]
      %v787 = vld [vmem:[%s785 + $0x8] sm:$0xff]
      %v788 = vld [vmem:[%s785 + $0x10] sm:$0xff]
      %v789 = vld [vmem:[%s785 + $0x18] sm:$0xff]
      %v790 = vld [vmem:[%s785 + $0x20] sm:$0xff]
      %v791 = vld [vmem:[%s785 + $0x28] sm:$0xff]
      %v792 = vld [vmem:[%s785 + $0x30] sm:$0xff]
      %v793 = vld [vmem:[%s785 + $0x38] sm:$0xff]
      %v794 = vld [vmem:[%s785 + $0x40] sm:$0xff]
      %v795 = vld [vmem:[%s785 + $0x48] sm:$0xff]
      %v796 = vld [vmem:[%s785 + $0x50] sm:$0xff]
      %v797 = vld [vmem:[%s785 + $0x58] sm:$0xff]
      %v798 = vld [vmem:[%s785 + $0x60] sm:$0xff]
      %v799 = vld [vmem:[%s785 + $0x68] sm:$0xff]
      %v800 = vld [vmem:[%s785 + $0x70] sm:$0xff]
      %v801 = vld [vmem:[%s785 + $0x78] sm:$0xff]
      %802 = vmatprep.subr.mxu0 0.0
      %803 = vmatpush1.msra.mxu0 %v801
      %804 = vmatprep.subr.mxu0 0.0
      %805 = vmatpush1.msra.mxu0 %v800
      %806 = vmatprep.subr.mxu0 0.0
      %807 = vmatpush1.msra.mxu0 %v799
      %808 = vmatprep.subr.mxu0 0.0
      %809 = vmatpush1.msra.mxu0 %v798
      %810 = vmatprep.subr.mxu0 0.0
      %811 = vmatpush1.msra.mxu0 %v797
      %812 = vmatprep.subr.mxu0 0.0
      %813 = vmatpush1.msra.mxu0 %v796
      %814 = vmatprep.subr.mxu0 0.0
      %815 = vmatpush1.msra.mxu0 %v795
      %816 = vmatprep.subr.mxu0 0.0
      %817 = vmatpush1.msra.mxu0 %v794
      %818 = vmatprep.subr.mxu0 0.0
      %819 = vmatpush1.msra.mxu0 %v793
      %820 = vmatprep.subr.mxu0 0.0
      %821 = vmatpush1.msra.mxu0 %v792
      %822 = vmatprep.subr.mxu0 0.0
      %823 = vmatpush1.msra.mxu0 %v791
      %824 = vmatprep.subr.mxu0 0.0
      %825 = vmatpush1.msra.mxu0 %v790
      %826 = vmatprep.subr.mxu0 0.0
      %827 = vmatpush1.msra.mxu0 %v789
      %828 = vmatprep.subr.mxu0 0.0
      %829 = vmatpush1.msra.mxu0 %v788
      %830 = vmatprep.subr.mxu0 0.0
      %831 = vmatpush1.msra.mxu0 %v787
      %832 = vmatprep.subr.mxu0 0.0
      %833 = vmatpush1.msra.mxu0 %v786
      %834 = vmatprep.subr.mxu0 0.0
      %835 = vmatpush2.msra.mxu0 0.0
      %836 = vmatprep.subr.mxu0 0.0
      %837 = vmatpush2.msra.mxu0 0.0
      %838 = vmatprep.subr.mxu0 0.0
      %839 = vmatpush2.msra.mxu0 0.0
      %840 = vmatprep.subr.mxu0 0.0
      %841 = vmatpush2.msra.mxu0 0.0
      %842 = vmatprep.subr.mxu0 0.0
      %843 = vmatpush2.msra.mxu0 0.0
      %844 = vmatprep.subr.mxu0 0.0
      %845 = vmatpush2.msra.mxu0 0.0
      %846 = vmatprep.subr.mxu0 0.0
      %847 = vmatpush2.msra.mxu0 0.0
      %848 = vmatprep.subr.mxu0 0.0
      %849 = vmatpush2.msra.mxu0 0.0
      %850 = vmatprep.subr.mxu0 0.0
      %851 = vmatpush2.msra.mxu0 0.0
      %852 = vmatprep.subr.mxu0 0.0
      %853 = vmatpush2.msra.mxu0 0.0
      %854 = vmatprep.subr.mxu0 0.0
      %855 = vmatpush2.msra.mxu0 0.0
      %856 = vmatprep.subr.mxu0 0.0
      %857 = vmatpush2.msra.mxu0 0.0
      %858 = vmatprep.subr.mxu0 0.0
      %859 = vmatpush2.msra.mxu0 0.0
      %860 = vmatprep.subr.mxu0 0.0
      %861 = vmatpush2.msra.mxu0 0.0
      %862 = vmatprep.subr.mxu0 0.0
      %863 = vmatpush2.msra.mxu0 0.0
      %864 = vmatprep.subr.mxu0 0.0
      %865 = vmatpush2.msra.mxu0 0.0
      %866 = vmatprep.mubr.f32.mxu0 0.0
      %867 = vmatmul.mubr.f32.gmra.mxu0 %v681
      %v868 = vpop.f32.mrf.mxu0
      %v869 = vadd.f32 0.0, %v868
      %v870 = vpop.f32.mrf.mxu0
      %871 = vdwg.mxu0
      %872 = vmatprep.subr.mxu0 0.0
      %873 = vmatpush1.msra.mxu0 0.0
      %874 = vmatprep.subr.mxu0 0.0
      %875 = vmatpush1.msra.mxu0 0.0
      %876 = vmatprep.subr.mxu0 0.0
      %877 = vmatpush1.msra.mxu0 0.0
      %878 = vmatprep.subr.mxu0 0.0
      %879 = vmatpush1.msra.mxu0 0.0
      %880 = vmatprep.subr.mxu0 0.0
      %881 = vmatpush1.msra.mxu0 0.0
      %882 = vmatprep.subr.mxu0 0.0
      %883 = vmatpush1.msra.mxu0 0.0
      %884 = vmatprep.subr.mxu0 0.0
      %885 = vmatpush1.msra.mxu0 0.0
      %886 = vmatprep.subr.mxu0 0.0
      %887 = vmatpush1.msra.mxu0 0.0
      %888 = vmatprep.subr.mxu0 0.0
      %889 = vmatpush1.msra.mxu0 0.0
      %890 = vmatprep.subr.mxu0 0.0
      %891 = vmatpush1.msra.mxu0 0.0
      %892 = vmatprep.subr.mxu0 0.0
      %893 = vmatpush1.msra.mxu0 0.0
      %894 = vmatprep.subr.mxu0 0.0
      %895 = vmatpush1.msra.mxu0 0.0
      %896 = vmatprep.subr.mxu0 0.0
      %897 = vmatpush1.msra.mxu0 0.0
      %898 = vmatprep.subr.mxu0 0.0
      %899 = vmatpush1.msra.mxu0 0.0
      %900 = vmatprep.subr.mxu0 0.0
      %901 = vmatpush1.msra.mxu0 0.0
      %902 = vmatprep.subr.mxu0 0.0
      %903 = vmatpush1.msra.mxu0 %v765
      %904 = vmatprep.subr.mxu0 0.0
      %905 = vmatpush2.msra.mxu0 0.0
      %906 = vmatprep.subr.mxu0 0.0
      %907 = vmatpush2.msra.mxu0 0.0
      %908 = vmatprep.subr.mxu0 0.0
      %909 = vmatpush2.msra.mxu0 0.0
      %910 = vmatprep.subr.mxu0 0.0
      %911 = vmatpush2.msra.mxu0 0.0
      %912 = vmatprep.subr.mxu0 0.0
      %913 = vmatpush2.msra.mxu0 0.0
      %914 = vmatprep.subr.mxu0 0.0
      %915 = vmatpush2.msra.mxu0 0.0
      %916 = vmatprep.subr.mxu0 0.0
      %917 = vmatpush2.msra.mxu0 0.0
      %918 = vmatprep.subr.mxu0 0.0
      %919 = vmatpush2.msra.mxu0 0.0
      %920 = vmatprep.subr.mxu0 0.0
      %921 = vmatpush2.msra.mxu0 0.0
      %922 = vmatprep.subr.mxu0 0.0
      %923 = vmatpush2.msra.mxu0 0.0
      %924 = vmatprep.subr.mxu0 0.0
      %925 = vmatpush2.msra.mxu0 0.0
      %926 = vmatprep.subr.mxu0 0.0
      %927 = vmatpush2.msra.mxu0 0.0
      %928 = vmatprep.subr.mxu0 0.0
      %929 = vmatpush2.msra.mxu0 0.0
      %930 = vmatprep.subr.mxu0 0.0
      %931 = vmatpush2.msra.mxu0 0.0
      %932 = vmatprep.subr.mxu0 0.0
      %933 = vmatpush2.msra.mxu0 0.0
      %934 = vmatprep.subr.mxu0 0.0
      %935 = vmatpush2.msra.mxu0 0.0
      %936 = vmatprep.mubr.f32.mxu0 0.0
      %937 = vmatmul.mubr.f32.gmra.mxu0 %v454
      %v938 = vpop.f32.mrf.mxu0
      %v939 = vadd.f32 0.0, %v938
      %v940 = vpop.f32.mrf.mxu0
      %941 = vdwg.mxu0
      %942 = vmatprep.subr.mxu0 0.0
      %943 = vmatpush1.msra.mxu0 %v784
      %944 = vmatprep.subr.mxu0 0.0
      %945 = vmatpush1.msra.mxu0 %v783
      %946 = vmatprep.subr.mxu0 0.0
      %947 = vmatpush1.msra.mxu0 %v782
      %948 = vmatprep.subr.mxu0 0.0
      %949 = vmatpush1.msra.mxu0 %v781
      %950 = vmatprep.subr.mxu0 0.0
      %951 = vmatpush1.msra.mxu0 %v780
      %952 = vmatprep.subr.mxu0 0.0
      %953 = vmatpush1.msra.mxu0 %v779
      %954 = vmatprep.subr.mxu0 0.0
      %955 = vmatpush1.msra.mxu0 %v778
      %956 = vmatprep.subr.mxu0 0.0
      %957 = vmatpush1.msra.mxu0 %v777
      %958 = vmatprep.subr.mxu0 0.0
      %959 = vmatpush1.msra.mxu0 %v776
      %960 = vmatprep.subr.mxu0 0.0
      %961 = vmatpush1.msra.mxu0 %v775
      %962 = vmatprep.subr.mxu0 0.0
      %963 = vmatpush1.msra.mxu0 %v774
      %964 = vmatprep.subr.mxu0 0.0
      %965 = vmatpush1.msra.mxu0 %v773
      %966 = vmatprep.subr.mxu0 0.0
      %967 = vmatpush1.msra.mxu0 %v772
      %968 = vmatprep.subr.mxu0 0.0
      %969 = vmatpush1.msra.mxu0 %v771
      %970 = vmatprep.subr.mxu0 0.0
      %971 = vmatpush1.msra.mxu0 %v770
      %972 = vmatprep.subr.mxu0 0.0
      %973 = vmatpush1.msra.mxu0 %v769
      %974 = vmatprep.subr.mxu0 0.0
      %975 = vmatpush2.msra.mxu0 0.0
      %976 = vmatprep.subr.mxu0 0.0
      %977 = vmatpush2.msra.mxu0 0.0
      %978 = vmatprep.subr.mxu0 0.0
      %979 = vmatpush2.msra.mxu0 0.0
      %980 = vmatprep.subr.mxu0 0.0
      %981 = vmatpush2.msra.mxu0 0.0
      %982 = vmatprep.subr.mxu0 0.0
      %983 = vmatpush2.msra.mxu0 0.0
      %984 = vmatprep.subr.mxu0 0.0
      %985 = vmatpush2.msra.mxu0 0.0
      %986 = vmatprep.subr.mxu0 0.0
      %987 = vmatpush2.msra.mxu0 0.0
      %988 = vmatprep.subr.mxu0 0.0
      %989 = vmatpush2.msra.mxu0 0.0
      %990 = vmatprep.subr.mxu0 0.0
      %991 = vmatpush2.msra.mxu0 0.0
      %992 = vmatprep.subr.mxu0 0.0
      %993 = vmatpush2.msra.mxu0 0.0
      %994 = vmatprep.subr.mxu0 0.0
      %995 = vmatpush2.msra.mxu0 0.0
      %996 = vmatprep.subr.mxu0 0.0
      %997 = vmatpush2.msra.mxu0 0.0
      %998 = vmatprep.subr.mxu0 0.0
      %999 = vmatpush2.msra.mxu0 0.0
      %1000 = vmatprep.subr.mxu0 0.0
      %1001 = vmatpush2.msra.mxu0 0.0
      %1002 = vmatprep.subr.mxu0 0.0
      %1003 = vmatpush2.msra.mxu0 0.0
      %1004 = vmatprep.subr.mxu0 0.0
      %1005 = vmatpush2.msra.mxu0 0.0
      %1006 = vmatprep.mubr.f32.mxu0 0.0
      %1007 = vmatmul.mubr.f32.gmra.mxu0 %v681
      %v1008 = vpop.f32.mrf.mxu0
      %v1009 = vadd.f32 %v939, %v1008
      %v1010 = vpop.f32.mrf.mxu0
      %1011 = vdwg.mxu0
      %1012 = vmatprep.subr.mxu0 0.0
      %1013 = vmatpush1.msra.mxu0 0.0
      %1014 = vmatprep.subr.mxu0 0.0
      %1015 = vmatpush1.msra.mxu0 0.0
      %1016 = vmatprep.subr.mxu0 0.0
      %1017 = vmatpush1.msra.mxu0 0.0
      %1018 = vmatprep.subr.mxu0 0.0
      %1019 = vmatpush1.msra.mxu0 0.0
      %1020 = vmatprep.subr.mxu0 0.0
      %1021 = vmatpush1.msra.mxu0 0.0
      %1022 = vmatprep.subr.mxu0 0.0
      %1023 = vmatpush1.msra.mxu0 0.0
      %1024 = vmatprep.subr.mxu0 0.0
      %1025 = vmatpush1.msra.mxu0 0.0
      %1026 = vmatprep.subr.mxu0 0.0
      %1027 = vmatpush1.msra.mxu0 0.0
      %1028 = vmatprep.subr.mxu0 0.0
      %1029 = vmatpush1.msra.mxu0 0.0
      %1030 = vmatprep.subr.mxu0 0.0
      %1031 = vmatpush1.msra.mxu0 0.0
      %1032 = vmatprep.subr.mxu0 0.0
      %1033 = vmatpush1.msra.mxu0 0.0
      %1034 = vmatprep.subr.mxu0 0.0
      %1035 = vmatpush1.msra.mxu0 0.0
      %1036 = vmatprep.subr.mxu0 0.0
      %1037 = vmatpush1.msra.mxu0 0.0
      %1038 = vmatprep.subr.mxu0 0.0
      %1039 = vmatpush1.msra.mxu0 0.0
      %1040 = vmatprep.subr.mxu0 0.0
      %1041 = vmatpush1.msra.mxu0 0.0
      %1042 = vmatprep.subr.mxu0 0.0
      %1043 = vmatpush1.msra.mxu0 %v869
      %1044 = vmatprep.subr.mxu0 0.0
      %1045 = vmatpush2.msra.mxu0 0.0
      %1046 = vmatprep.subr.mxu0 0.0
      %1047 = vmatpush2.msra.mxu0 0.0
      %1048 = vmatprep.subr.mxu0 0.0
      %1049 = vmatpush2.msra.mxu0 0.0
      %1050 = vmatprep.subr.mxu0 0.0
      %1051 = vmatpush2.msra.mxu0 0.0
      %1052 = vmatprep.subr.mxu0 0.0
      %1053 = vmatpush2.msra.mxu0 0.0
      %1054 = vmatprep.subr.mxu0 0.0
      %1055 = vmatpush2.msra.mxu0 0.0
      %1056 = vmatprep.subr.mxu0 0.0
      %1057 = vmatpush2.msra.mxu0 0.0
      %1058 = vmatprep.subr.mxu0 0.0
      %1059 = vmatpush2.msra.mxu0 0.0
      %1060 = vmatprep.subr.mxu0 0.0
      %1061 = vmatpush2.msra.mxu0 0.0
      %1062 = vmatprep.subr.mxu0 0.0
      %1063 = vmatpush2.msra.mxu0 0.0
      %1064 = vmatprep.subr.mxu0 0.0
      %1065 = vmatpush2.msra.mxu0 0.0
      %1066 = vmatprep.subr.mxu0 0.0
      %1067 = vmatpush2.msra.mxu0 0.0
      %1068 = vmatprep.subr.mxu0 0.0
      %1069 = vmatpush2.msra.mxu0 0.0
      %1070 = vmatprep.subr.mxu0 0.0
      %1071 = vmatpush2.msra.mxu0 0.0
      %1072 = vmatprep.subr.mxu0 0.0
      %1073 = vmatpush2.msra.mxu0 0.0
      %1074 = vmatprep.subr.mxu0 0.0
      %1075 = vmatpush2.msra.mxu0 0.0
      %1076 = vmatprep.mubr.f32.mxu0 0.0
      %1077 = vmatmul.mubr.f32.gmra.mxu0 %v597
      %v1078 = vpop.f32.mrf.mxu0
      %v1079 = vadd.f32 0.0, %v1078
      %v1080 = vpop.f32.mrf.mxu0
      %1081 = vdwg.mxu0
      %v1082 = vadd.f32 %v1009, %v1079
      %v1083 = vld [vmem:[%s4] sm:$0x1]
      %v1085 = vlaneseq
      %v1086 = vshrl.u32 %v1085, 7
      %v1087 = vsub.s32 0, %v1086
      %v1088 = vrot.slane %v1083, %v1087
      %v1090 = vadd.f32 %v1082, %v1088
      %v1091 = vadd.f32 %v1090, %v248
      %1092 = vst [vmem:[%s247] sm:$0xff] %v1091
      %p1093 = scmp.lt.s32.totalorder %s18, 1
      %s1094 = scalar_select %p1093, %s18, 1
      %s1095 = smul.addr %s1094, 8
      %s1096 = scalar_lea.vmem %s6, %s1095
      // Predicated region
      $region45: #{dcr_block.1} parent=43 // pred_check
        %p1097 = pneg %p167
      $region46: #{dcr_block.1} parent=43 // pred_check_branch
        %1099 = sbr.rel (%p1097) target = $region48
      $region47: #{dcr_block.1} parent=43 // pred_region
        _
      $region48: #{dcr_block.1} parent=43 // pred_fallthru
        _
    $region44: #{dcr_block.1} parent=5 // pred_fallthru
      _
    %p1100 = scmp.le.s32.totalorder 2, %s13
    // Predicated region
    $region49: #{dcr_block.1} parent=5 // pred_check
      %p1101 = pneg %p1100
    $region50: #{dcr_block.1} parent=5 // pred_check_branch
      %1103 = sbr.rel (%p1101) target = $region52
    $region51: #{dcr_block.1} parent=5 // pred_region
      %s1104 = ssub.s32 %s13, 2
      // Predicated region
      $region53: #{dcr_block.1} parent=51 // pred_check
        %p1105 = pneg %p173
      $region54: #{dcr_block.1} parent=51 // pred_check_branch
        %1107 = sbr.rel (%p1105) target = $region56
      $region55: #{dcr_block.1} parent=51 // pred_region
        %p1108 = scmp.lt.s32.totalorder %s19, 1
        %s1109 = scalar_select %p1108, %s19, 1
        %s1110 = smul.addr %s1109, 8
        %s1111 = scalar_lea.vmem %s6, %s1110
      $region56: #{dcr_block.1} parent=51 // pred_fallthru
        _
    $region52: #{dcr_block.1} parent=5 // pred_fallthru
      _
  $region6: #{dcr_block.1} parent=0 // loop_footer
    %s17 = sadd.s32 1, %s13
  $region7: #{dcr_block.1} parent=0 // loop_footer_branch
    %12 = sbr.rel target = $region3
  $region8: #{dcr_block.1} parent=0 // loop_exit
    _

</llo_original>
